<compile_context>
chip_gen: v7x
topology: tpu7x:2x2x1
jax: 0.10.0
libtpu: 0.0.40
codegen_flags: <defaults>
</compile_context>

<pallas_src>
import functools

import jax
import jax.numpy as jnp
from jax.experimental import pallas as pl
from jax.experimental.pallas import tpu as pltpu

POOL_H, POOL_W = 3, 4          # nn.AvgPool2d((3, 4)): 3 over freq (H), 4 over time (W)
BN_EPS = 1e-5


# ----------------------------------------------------------------------------
# Fused Pallas kernel
# ----------------------------------------------------------------------------
def _fused_res8_kernel(x_ref, w0p_ref, wcat_ref, o_ref, apad_ref, *, B, T, F, C):
    """Entire Res8 + L2 forward for one batch group, fully resident in VMEM.

    x_ref   : ((T+2)*B, F)           time-zero-padded input; rows = t_pad*B + b
    w0p_ref : (3, F, 3*HP*C)         conv0, dh folded into an F-band, 1/12 folded,
                                     output lanes ordered (f_out%3, f_out//3, c)
    wcat_ref: (6, 3*HP*C, HP*C)      conv1..6, dh folded into an HP-band over lane
                                     blocks, the 3 dw taps stacked along K
    o_ref   : (B, C)                 L2-normalized embeddings
    apad_ref: VMEM ((WP+2)*B, HP*C)  main activations; rows = (wp+1)*B + b (zero
                                     w-halo), lanes = hp*C + c (lane-aligned)
    """
    HP, WP = F // POOL_H, T // POOL_W
    HPC = HP * C                     # main-layer lane width (= 128 for C=32, F=12)
    WPB = WP * B                     # main-layer row count
    NHW = B * HP * WP                # per-channel element count for BatchNorm
    f32 = jnp.float32

    # Zero the w-halo rows once per group (interior is always fully rewritten).
    apad_ref[...] = jnp.zeros_like(apad_ref)

    # ---------------- conv0 (+ReLU) + AvgPool(3, 4), whole batch at once --------
    # dh (freq) taps and the 1/12 pool factor live in w0p, so each dw tap is one
    # matmul whose LHS is a contiguous T*B-row window of the padded input.
    z = jnp.dot(x_ref[0:T * B, :], w0p_ref[0], preferred_element_type=f32)
    for dw in range(1, 3):
        z = z + jnp.dot(x_ref[dw * B:dw * B + T * B, :], w0p_ref[dw],
                        preferred_element_type=f32)
    y0 = jnp.maximum(z, 0.0)                                   # (T*B, 3*HP*C)

    # Freq pool: lanes are ordered (j, hp, c) with f_out = 3*hp + j, so the 3-wide
    # freq window is a sum of three aligned HP*C-lane blocks.
    yf = y0[:, 0:HPC]
    for j in range(1, POOL_H):
        yf = yf + y0[:, j * HPC:(j + 1) * HPC]                 # (T*B, HP*C)

    # Time pool: rows (4*wp + j)*B + b, j = 0..3  ->  main-layout rows wp*B + b.
    for wp in range(WP):
        blk = yf[POOL_W * wp * B:POOL_W * wp * B + B]
        for j in range(1, POOL_W):
            r0 = (POOL_W * wp + j) * B
            blk = blk + yf[r0:r0 + B]
        apad_ref[(wp + 1) * B:(wp + 2) * B, :] = blk

    old_x = apad_ref[B:B + WPB, :]    # pooled activation == residual state (8,128)

    # -------- BatchNorm2d(affine=False), training-mode batch statistics --------
    def lane_allsum(row):
        # Per-channel total over the HP lane-blocks, replicated to every block.
        # Relies on the lane width being exactly HP*C (true by construction).
        if HP & (HP - 1) == 0:                       # log-step rolls (HP = 2^k)
            tot = row
            shift = C
            while shift < HPC:
                tot = tot + pltpu.roll(tot, shift, axis=1)
                shift *= 2
            return tot
        tot = row
        for k in range(1, HP):
            tot = tot + pltpu.roll(row, k * C, axis=1)
        return tot

    def batch_norm(v):
        rowsum = jnp.sum(v, axis=0, keepdims=True)               # (1, HP*C)
        mean = lane_allsum(rowsum) * (1.0 / NHW)
        d = v - mean
        dsq = jnp.sum(d * d, axis=0, keepdims=True)
        var = lane_allsum(dsq) * (1.0 / NHW)                     # biased variance
        return d * jax.lax.rsqrt(var + BN_EPS)

    # ---------- layers 1..6: one K-stacked matmul + ReLU (+residual) + BN -------
    x_cur = old_x
    for li in range(6):
        lhs = jnp.concatenate(
            [apad_ref[dw * B:dw * B + WPB, :] for dw in range(3)], axis=1)
        y = jnp.maximum(
            jnp.dot(lhs, wcat_ref[li], preferred_element_type=f32), 0.0)
        if (li + 1) % 2 == 0:            # PyTorch i = li+1: residual on even i
            s = y + old_x
            old_x = s                    # residual carries the pre-BN sum
            x_cur = batch_norm(s)
        else:
            x_cur = batch_norm(y)
        if li < 5:                       # feed the next conv
            apad_ref[B:B + WPB, :] = x_cur

    # ---------------- spatial mean + L2 normalize ----------------
    sh = x_cur[0:B]
    for wp in range(1, WP):              # sum over w  -> (B, HP*C)
        sh = sh + x_cur[wp * B:(wp + 1) * B]
    emb = sh[:, 0:C]
    for hp in range(1, HP):              # sum over h  -> (B, C)
        emb = emb + sh[:, hp * C:(hp + 1) * C]
    emb = emb * (1.0 / (HP * WP))

    sq = jnp.sum(emb * emb, axis=-1, keepdims=True)              # (B, 1)
    # F.normalize(p=2, dim=-1, eps=1e-12): x / max(||x||, 1e-12)
    o_ref[...] = emb * jax.lax.rsqrt(jnp.maximum(sq, 1e-24))


# ----------------------------------------------------------------------------
# Wrappers
# ----------------------------------------------------------------------------
def pack_params(params, F):
    """One-time weight pre-packing (call once, outside the jitted forward).

    conv0   -> w0p  (3, F, 3*HP*C): dh folded as an F-band, output lanes ordered
               (f_out%3, f_out//3, c) so AvgPool's freq window is lane-aligned;
               1/12 folded in (valid because ReLU is positively homogeneous).
    conv1..6 -> wcat (6, 3*HP*C, HP*C): dh folded as an HP-band over lane blocks,
               the 3 dw taps stacked along K -> one matmul per layer.
    """
    C = params["conv0"].shape[-1]
    HP = F // POOL_H

    selF = jnp.stack([jnp.eye(F, k=1 - dh, dtype=jnp.float32) for dh in range(3)])
    w0 = params["conv0"][:, :, 0, :]                               # (3, 3, C)
    w0p = jnp.einsum("dio,dwc->wioc", selF, w0) / float(POOL_H * POOL_W)
    w0p = w0p.reshape(3, F, HP, POOL_H, C).transpose(0, 1, 3, 2, 4)
    w0p = w0p.reshape(3, F, POOL_H * HP * C)

    selH = jnp.stack([jnp.eye(HP, k=1 - dh, dtype=jnp.float32) for dh in range(3)])
    wst = jnp.stack([params[f"conv{i}"] for i in range(1, 7)], axis=0)  # (6,3,3,C,C)
    wcat = jnp.einsum("dio,ldwce->lwicoe", selH, wst)              # (6,3,HP,C,HP,C)
    wcat = wcat.reshape(6, 3 * HP * C, HP * C)
    return {"w0p": w0p, "wcat": wcat}


def triplet_tcresnet8_forward(packed, audio):
    """audio: (B, T, F) or (G, B, T, F) float32 -> (B, C) or (G, B, C) embeddings.

    Each leading-axis group is an independent batch (BatchNorm stats are per
    group, matching the module applied per group).  The group grid axis is
    'parallel' (megacore on v7x) and the packed weights use constant index_maps
    so they are DMA'd once and stay VMEM-resident across grid steps.
    """
    squeeze = audio.ndim == 3
    if squeeze:
        audio = audio[None]
    G, B, T, F = audio.shape
    # AvgPool((3,4)) is remainder-free for these shapes (the module drops remainders).
    assert F % POOL_H == 0 and T % POOL_W == 0
    HP, WP = F // POOL_H, T // POOL_W
    HPC = packed["wcat"].shape[-1]
    C = HPC // HP
    assert HPC == HP * C and packed["w0p"].shape == (3, F, POOL_H * HPC)

    # Time zero-halo + (t, b)-row-major layout, done once by cheap XLA ops.
    x = jnp.transpose(audio, (0, 2, 1, 3))                      # (G, T, B, F)
    x = jnp.pad(x, ((0, 0), (1, 1), (0, 0), (0, 0)))            # pad time by 1
    x = x.reshape(G, (T + 2) * B, F)

    kernel = functools.partial(_fused_res8_kernel, B=B, T=T, F=F, C=C)
    out = pl.pallas_call(
        kernel,
        out_shape=jax.ShapeDtypeStruct((G, B, C), jnp.float32),
        grid=(G,),
        in_specs=[
            pl.BlockSpec((None, (T + 2) * B, F), lambda g: (g, 0, 0)),
            pl.BlockSpec((3, F, POOL_H * HPC), lambda g: (0, 0, 0)),   # resident
            pl.BlockSpec((6, 3 * HPC, HPC), lambda g: (0, 0, 0)),      # resident
        ],
        out_specs=pl.BlockSpec((None, B, C), lambda g: (g, 0, 0)),
        scratch_shapes=[
            pltpu.VMEM(((WP + 2) * B, HPC), jnp.float32),   # w-haloed activation
        ],
        compiler_params=pltpu.CompilerParams(
            dimension_semantics=("parallel",)),
    )(x, packed["w0p"], packed["wcat"])
    return out[0] if squeeze else out


# ----------------------------------------------------------------------------
# Pure-JAX reference (for correctness check)
# ----------------------------------------------------------------------------
def reference_forward(params, audio):
    x = jnp.transpose(audio, (0, 2, 1))[:, None, :, :]      # (B, 1, F, T) NCHW

    def conv(x, w_hwio):
        w = jnp.transpose(w_hwio, (3, 2, 0, 1))              # OIHW
        return jax.lax.conv_general_dilated(
            x, w, (1, 1), ((1, 1), (1, 1)),
            dimension_numbers=("NCHW", "OIHW", "NCHW"))

    def bn(x):
        mean = x.mean(axis=(0, 2, 3), keepdims=True)
        var = ((x - mean) ** 2).mean(axis=(0, 2, 3), keepdims=True)
        return (x - mean) / jnp.sqrt(var + 1e-5)

    y = jax.nn.relu(conv(x, params["conv0"]))
    B, Cc, H, W = y.shape
    Ho, Wo = H // 3, W // 4
    y = y[:, :, :Ho * 3, :Wo * 4].reshape(B, Cc, Ho, 3, Wo, 4).mean(axis=(3, 5))
    old, x = y, y
    for i in range(1, 7):
        y = jax.nn.relu(conv(x, params[f"conv{i}"]))
        if i % 2 == 0:
            s = y + old
            old = s
            x = bn(s)
        else:
            x = bn(y)
    emb = x.reshape(B, Cc, -1).mean(axis=2)
    n = jnp.sqrt(jnp.sum(emb * emb, axis=-1, keepdims=True))
    return emb / jnp.maximum(n, 1e-12)


# ----------------------------------------------------------------------------
# Deterministic parameter init (shapes from Res8.__init__, bias=False convs)
# ----------------------------------------------------------------------------
def init_params(key, n_maps):
    keys = jax.random.split(key, 7)
    params = {
        "conv0": jax.random.normal(keys[0], (3, 3, 1, n_maps), jnp.float32)
        * (2.0 / (9 * 1)) ** 0.5
    }
    for i in range(1, 7):
        params[f"conv{i}"] = (
            jax.random.normal(keys[i], (3, 3, n_maps, n_maps), jnp.float32)
            * (2.0 / (9 * n_maps)) ** 0.5
        )
    return params


if __name__ == "__main__":
    B, T, Fdim = 2, 16, 12          # audio_signal: (batch, time, freq)
    EMB = 32                        # embedding_dim (small for the demo)

    key = jax.random.PRNGKey(0)
    kp, kx = jax.random.split(key)
    params = init_params(kp, EMB)
    audio = jax.random.normal(kx, (B, T, Fdim), jnp.float32)

    packed = pack_params(params, Fdim)               # one-time weight pre-pack
    fwd = jax.jit(triplet_tcresnet8_forward)

    out = jax.block_until_ready(fwd(packed, audio))
    ref = reference_forward(params, audio)
    assert out.shape == (B, EMB)
    err = float(jnp.max(jnp.abs(out - ref)))
    assert jnp.allclose(out, ref, atol=1e-4, rtol=1e-4), err

    # Grouped path: parallel grid over independent batches, resident weights.
    audio_g = jax.random.normal(jax.random.PRNGKey(1), (2, B, T, Fdim), jnp.float32)
    out_g = jax.block_until_ready(fwd(packed, audio_g))
    ref_g = jnp.stack([reference_forward(params, audio_g[g]) for g in range(2)])
    err_g = float(jnp.max(jnp.abs(out_g - ref_g)))
    assert out_g.shape == (2, B, EMB)
    assert jnp.allclose(out_g, ref_g, atol=1e-4, rtol=1e-4), err_g

    print("KERNEL_OK")
</pallas_src>

<mosaic_0001>
module attributes {stable_mosaic.version = 11 : i64} {
  func.func @_fused_res8_kernel(%arg0: i32, %arg1: memref<1x36x12xf32, #tpu.memory_space<vmem>>, %arg2: memref<3x12x384xf32, #tpu.memory_space<vmem>>, %arg3: memref<6x384x128xf32, #tpu.memory_space<vmem>>, %arg4: memref<1x2x32xf32, #tpu.memory_space<vmem>>, %arg5: memref<12x128xf32, #tpu.memory_space<vmem>>) attributes {dimension_semantics = [#tpu.dimension_semantics<parallel>], iteration_bounds = array<i64: 1>, scalar_prefetch = 0 : i64, scratch_operands = 1 : i64, tpu.core_type = #tpu.core_type<tc>, window_params = [{transform_indices = @transform_0, window_bounds = array<i64: 1, 36, 12>}, {pipeline_mode = #tpu.pipeline_mode<synchronous>, transform_indices = @transform_1, window_bounds = array<i64: 3, 12, 384>}, {pipeline_mode = #tpu.pipeline_mode<synchronous>, transform_indices = @transform_2, window_bounds = array<i64: 6, 384, 128>}, {transform_indices = @transform_3, window_bounds = array<i64: 1, 2, 32>}]} {
    %cst = arith.constant 0.000000e+00 : f32
    %0 = vector.broadcast %cst : f32 to vector<12x128xf32>
    %c0 = arith.constant 0 : index
    %c0_0 = arith.constant 0 : index
    %1 = vector.load %arg5[%c0, %c0_0] : memref<12x128xf32, #tpu.memory_space<vmem>>, vector<12x128xf32>
    tpu.vector_store %arg5[%c0, %c0_0], %0 {strides = array<i32>} : memref<12x128xf32, #tpu.memory_space<vmem>>, vector<12x128xf32>,
    %c0_1 = arith.constant 0 : index
    %c0_2 = arith.constant 0 : index
    %c0_3 = arith.constant 0 : index
    %2 = vector.load %arg1[%c0_1, %c0_2, %c0_3] : memref<1x36x12xf32, #tpu.memory_space<vmem>>, vector<1x32x12xf32>
    %3 = vector.shape_cast %2 : vector<1x32x12xf32> to vector<32x12xf32>
    %c0_4 = arith.constant 0 : index
    %c0_5 = arith.constant 0 : index
    %c0_6 = arith.constant 0 : index
    %4 = vector.load %arg2[%c0_4, %c0_5, %c0_6] : memref<3x12x384xf32, #tpu.memory_space<vmem>>, vector<1x12x384xf32>
    %5 = vector.shape_cast %4 : vector<1x12x384xf32> to vector<12x384xf32>
    %cst_7 = arith.constant dense<0.000000e+00> : vector<32x384xf32>
    %6 = tpu.matmul %3, %5, %cst_7 {dimension_numbers = #tpu.dot_dimension_numbers<[1], [0], [0], [1], [0, 0, 1, 1], [], []>} : vector<32x12xf32>, vector<12x384xf32>, vector<32x384xf32> -> vector<32x384xf32>
    %c0_8 = arith.constant 0 : index
    %c2 = arith.constant 2 : index
    %c0_9 = arith.constant 0 : index
    %7 = vector.load %arg1[%c0_8, %c2, %c0_9] : memref<1x36x12xf32, #tpu.memory_space<vmem>>, vector<1x32x12xf32>
    %8 = vector.shape_cast %7 : vector<1x32x12xf32> to vector<32x12xf32>
    %c1 = arith.constant 1 : index
    %c0_10 = arith.constant 0 : index
    %c0_11 = arith.constant 0 : index
    %9 = vector.load %arg2[%c1, %c0_10, %c0_11] : memref<3x12x384xf32, #tpu.memory_space<vmem>>, vector<1x12x384xf32>
    %10 = vector.shape_cast %9 : vector<1x12x384xf32> to vector<12x384xf32>
    %cst_12 = arith.constant dense<0.000000e+00> : vector<32x384xf32>
    %11 = tpu.matmul %8, %10, %cst_12 {dimension_numbers = #tpu.dot_dimension_numbers<[1], [0], [0], [1], [0, 0, 1, 1], [], []>} : vector<32x12xf32>, vector<12x384xf32>, vector<32x384xf32> -> vector<32x384xf32>
    %12 = arith.addf %6, %11 : vector<32x384xf32>
    %c0_13 = arith.constant 0 : index
    %c4 = arith.constant 4 : index
    %c0_14 = arith.constant 0 : index
    %13 = vector.load %arg1[%c0_13, %c4, %c0_14] : memref<1x36x12xf32, #tpu.memory_space<vmem>>, vector<1x32x12xf32>
    %14 = vector.shape_cast %13 : vector<1x32x12xf32> to vector<32x12xf32>
    %c2_15 = arith.constant 2 : index
    %c0_16 = arith.constant 0 : index
    %c0_17 = arith.constant 0 : index
    %15 = vector.load %arg2[%c2_15, %c0_16, %c0_17] : memref<3x12x384xf32, #tpu.memory_space<vmem>>, vector<1x12x384xf32>
    %16 = vector.shape_cast %15 : vector<1x12x384xf32> to vector<12x384xf32>
    %cst_18 = arith.constant dense<0.000000e+00> : vector<32x384xf32>
    %17 = tpu.matmul %14, %16, %cst_18 {dimension_numbers = #tpu.dot_dimension_numbers<[1], [0], [0], [1], [0, 0, 1, 1], [], []>} : vector<32x12xf32>, vector<12x384xf32>, vector<32x384xf32> -> vector<32x384xf32>
    %18 = arith.addf %12, %17 : vector<32x384xf32>
    %cst_19 = arith.constant 0.000000e+00 : f32
    %19 = vector.broadcast %cst_19 : f32 to vector<32x384xf32>
    %20 = arith.maximumf %18, %19 : vector<32x384xf32>
    %21 = vector.extract_strided_slice %20 {offsets = [0, 0], sizes = [32, 128], strides = [1, 1]} : vector<32x384xf32> to vector<32x128xf32>
    %22 = vector.extract_strided_slice %20 {offsets = [0, 128], sizes = [32, 128], strides = [1, 1]} : vector<32x384xf32> to vector<32x128xf32>
    %23 = arith.addf %21, %22 : vector<32x128xf32>
    %24 = vector.extract_strided_slice %20 {offsets = [0, 256], sizes = [32, 128], strides = [1, 1]} : vector<32x384xf32> to vector<32x128xf32>
    %25 = arith.addf %23, %24 : vector<32x128xf32>
    %26 = vector.extract_strided_slice %25 {offsets = [0, 0], sizes = [2, 128], strides = [1, 1]} : vector<32x128xf32> to vector<2x128xf32>
    %27 = vector.extract_strided_slice %25 {offsets = [2, 0], sizes = [2, 128], strides = [1, 1]} : vector<32x128xf32> to vector<2x128xf32>
    %28 = arith.addf %26, %27 : vector<2x128xf32>
    %29 = vector.extract_strided_slice %25 {offsets = [4, 0], sizes = [2, 128], strides = [1, 1]} : vector<32x128xf32> to vector<2x128xf32>
    %30 = arith.addf %28, %29 : vector<2x128xf32>
    %31 = vector.extract_strided_slice %25 {offsets = [6, 0], sizes = [2, 128], strides = [1, 1]} : vector<32x128xf32> to vector<2x128xf32>
    %32 = arith.addf %30, %31 : vector<2x128xf32>
    %c2_20 = arith.constant 2 : index
    %c0_21 = arith.constant 0 : index
    %33 = vector.load %arg5[%c2_20, %c0_21] : memref<12x128xf32, #tpu.memory_space<vmem>>, vector<2x128xf32>
    tpu.vector_store %arg5[%c2_20, %c0_21], %32 {strides = array<i32>} : memref<12x128xf32, #tpu.memory_space<vmem>>, vector<2x128xf32>,
    %34 = vector.extract_strided_slice %25 {offsets = [8, 0], sizes = [2, 128], strides = [1, 1]} : vector<32x128xf32> to vector<2x128xf32>
    %35 = vector.extract_strided_slice %25 {offsets = [10, 0], sizes = [2, 128], strides = [1, 1]} : vector<32x128xf32> to vector<2x128xf32>
    %36 = arith.addf %34, %35 : vector<2x128xf32>
    %37 = vector.extract_strided_slice %25 {offsets = [12, 0], sizes = [2, 128], strides = [1, 1]} : vector<32x128xf32> to vector<2x128xf32>
    %38 = arith.addf %36, %37 : vector<2x128xf32>
    %39 = vector.extract_strided_slice %25 {offsets = [14, 0], sizes = [2, 128], strides = [1, 1]} : vector<32x128xf32> to vector<2x128xf32>
    %40 = arith.addf %38, %39 : vector<2x128xf32>
    %c4_22 = arith.constant 4 : index
    %c0_23 = arith.constant 0 : index
    %41 = vector.load %arg5[%c4_22, %c0_23] : memref<12x128xf32, #tpu.memory_space<vmem>>, vector<2x128xf32>
    tpu.vector_store %arg5[%c4_22, %c0_23], %40 {strides = array<i32>} : memref<12x128xf32, #tpu.memory_space<vmem>>, vector<2x128xf32>,
    %42 = vector.extract_strided_slice %25 {offsets = [16, 0], sizes = [2, 128], strides = [1, 1]} : vector<32x128xf32> to vector<2x128xf32>
    %43 = vector.extract_strided_slice %25 {offsets = [18, 0], sizes = [2, 128], strides = [1, 1]} : vector<32x128xf32> to vector<2x128xf32>
    %44 = arith.addf %42, %43 : vector<2x128xf32>
    %45 = vector.extract_strided_slice %25 {offsets = [20, 0], sizes = [2, 128], strides = [1, 1]} : vector<32x128xf32> to vector<2x128xf32>
    %46 = arith.addf %44, %45 : vector<2x128xf32>
    %47 = vector.extract_strided_slice %25 {offsets = [22, 0], sizes = [2, 128], strides = [1, 1]} : vector<32x128xf32> to vector<2x128xf32>
    %48 = arith.addf %46, %47 : vector<2x128xf32>
    %c6 = arith.constant 6 : index
    %c0_24 = arith.constant 0 : index
    %49 = vector.load %arg5[%c6, %c0_24] : memref<12x128xf32, #tpu.memory_space<vmem>>, vector<2x128xf32>
    tpu.vector_store %arg5[%c6, %c0_24], %48 {strides = array<i32>} : memref<12x128xf32, #tpu.memory_space<vmem>>, vector<2x128xf32>,
    %50 = vector.extract_strided_slice %25 {offsets = [24, 0], sizes = [2, 128], strides = [1, 1]} : vector<32x128xf32> to vector<2x128xf32>
    %51 = vector.extract_strided_slice %25 {offsets = [26, 0], sizes = [2, 128], strides = [1, 1]} : vector<32x128xf32> to vector<2x128xf32>
    %52 = arith.addf %50, %51 : vector<2x128xf32>
    %53 = vector.extract_strided_slice %25 {offsets = [28, 0], sizes = [2, 128], strides = [1, 1]} : vector<32x128xf32> to vector<2x128xf32>
    %54 = arith.addf %52, %53 : vector<2x128xf32>
    %55 = vector.extract_strided_slice %25 {offsets = [30, 0], sizes = [2, 128], strides = [1, 1]} : vector<32x128xf32> to vector<2x128xf32>
    %56 = arith.addf %54, %55 : vector<2x128xf32>
    %c8 = arith.constant 8 : index
    %c0_25 = arith.constant 0 : index
    %57 = vector.load %arg5[%c8, %c0_25] : memref<12x128xf32, #tpu.memory_space<vmem>>, vector<2x128xf32>
    tpu.vector_store %arg5[%c8, %c0_25], %56 {strides = array<i32>} : memref<12x128xf32, #tpu.memory_space<vmem>>, vector<2x128xf32>,
    %c2_26 = arith.constant 2 : index
    %c0_27 = arith.constant 0 : index
    %58 = vector.load %arg5[%c2_26, %c0_27] : memref<12x128xf32, #tpu.memory_space<vmem>>, vector<8x128xf32>
    %c0_28 = arith.constant 0 : index
    %c0_29 = arith.constant 0 : index
    %59 = vector.load %arg5[%c0_28, %c0_29] : memref<12x128xf32, #tpu.memory_space<vmem>>, vector<8x128xf32>
    %c2_30 = arith.constant 2 : index
    %c0_31 = arith.constant 0 : index
    %60 = vector.load %arg5[%c2_30, %c0_31] : memref<12x128xf32, #tpu.memory_space<vmem>>, vector<8x128xf32>
    %c4_32 = arith.constant 4 : index
    %c0_33 = arith.constant 0 : index
    %61 = vector.load %arg5[%c4_32, %c0_33] : memref<12x128xf32, #tpu.memory_space<vmem>>, vector<8x128xf32>
    %62 = tpu.concatenate %59, %60, %61 in 1 : vector<8x128xf32>, vector<8x128xf32>, vector<8x128xf32> -> vector<8x384xf32>
    %c0_34 = arith.constant 0 : index
    %c0_35 = arith.constant 0 : index
    %c0_36 = arith.constant 0 : index
    %63 = vector.load %arg3[%c0_34, %c0_35, %c0_36] : memref<6x384x128xf32, #tpu.memory_space<vmem>>, vector<1x384x128xf32>
    %64 = vector.shape_cast %63 : vector<1x384x128xf32> to vector<384x128xf32>
    %cst_37 = arith.constant dense<0.000000e+00> : vector<8x128xf32>
    %65 = tpu.matmul %62, %64, %cst_37 {dimension_numbers = #tpu.dot_dimension_numbers<[1], [0], [0], [1], [0, 0, 1, 1], [], []>} : vector<8x384xf32>, vector<384x128xf32>, vector<8x128xf32> -> vector<8x128xf32>
    %cst_38 = arith.constant 0.000000e+00 : f32
    %66 = vector.broadcast %cst_38 : f32 to vector<8x128xf32>
    %67 = arith.maximumf %65, %66 : vector<8x128xf32>
    %cst_39 = arith.constant dense<0.000000e+00> : vector<128xf32>
    %68 = vector.multi_reduction <add>, %67, %cst_39 [0] : vector<8x128xf32> to vector<128xf32>
    %69 = vector.shape_cast %68 : vector<128xf32> to vector<1x128xf32>
    %c32_i32 = arith.constant 32 : i32
    %70 = tpu.dynamic_rotate %69 by %c32_i32 dim 1 : vector<1x128xf32>, i32 -> vector<1x128xf32>
    %71 = arith.addf %69, %70 : vector<1x128xf32>
    %c64_i32 = arith.constant 64 : i32
    %72 = tpu.dynamic_rotate %71 by %c64_i32 dim 1 : vector<1x128xf32>, i32 -> vector<1x128xf32>
    %73 = arith.addf %71, %72 : vector<1x128xf32>
    %cst_40 = arith.constant 3.125000e-02 : f32
    %74 = vector.broadcast %cst_40 : f32 to vector<1x128xf32>
    %75 = arith.mulf %73, %74 : vector<1x128xf32>
    %76 = vector.broadcast %75 : vector<1x128xf32> to vector<8x128xf32>
    %77 = arith.subf %67, %76 : vector<8x128xf32>
    %78 = arith.mulf %77, %77 : vector<8x128xf32>
    %cst_41 = arith.constant dense<0.000000e+00> : vector<128xf32>
    %79 = vector.multi_reduction <add>, %78, %cst_41 [0] : vector<8x128xf32> to vector<128xf32>
    %80 = vector.shape_cast %79 : vector<128xf32> to vector<1x128xf32>
    %c32_i32_42 = arith.constant 32 : i32
    %81 = tpu.dynamic_rotate %80 by %c32_i32_42 dim 1 : vector<1x128xf32>, i32 -> vector<1x128xf32>
    %82 = arith.addf %80, %81 : vector<1x128xf32>
    %c64_i32_43 = arith.constant 64 : i32
    %83 = tpu.dynamic_rotate %82 by %c64_i32_43 dim 1 : vector<1x128xf32>, i32 -> vector<1x128xf32>
    %84 = arith.addf %82, %83 : vector<1x128xf32>
    %cst_44 = arith.constant 3.125000e-02 : f32
    %85 = vector.broadcast %cst_44 : f32 to vector<1x128xf32>
    %86 = arith.mulf %84, %85 : vector<1x128xf32>
    %cst_45 = arith.constant 9.99999974E-6 : f32
    %87 = vector.broadcast %cst_45 : f32 to vector<1x128xf32>
    %88 = arith.addf %86, %87 : vector<1x128xf32>
    %89 = math.rsqrt %88 : vector<1x128xf32>
    %90 = vector.broadcast %89 : vector<1x128xf32> to vector<8x128xf32>
    %91 = arith.mulf %77, %90 : vector<8x128xf32>
    %c2_46 = arith.constant 2 : index
    %c0_47 = arith.constant 0 : index
    %92 = vector.load %arg5[%c2_46, %c0_47] : memref<12x128xf32, #tpu.memory_space<vmem>>, vector<8x128xf32>
    tpu.vector_store %arg5[%c2_46, %c0_47], %91 {strides = array<i32>} : memref<12x128xf32, #tpu.memory_space<vmem>>, vector<8x128xf32>,
    %c0_48 = arith.constant 0 : index
    %c0_49 = arith.constant 0 : index
    %93 = vector.load %arg5[%c0_48, %c0_49] : memref<12x128xf32, #tpu.memory_space<vmem>>, vector<8x128xf32>
    %c2_50 = arith.constant 2 : index
    %c0_51 = arith.constant 0 : index
    %94 = vector.load %arg5[%c2_50, %c0_51] : memref<12x128xf32, #tpu.memory_space<vmem>>, vector<8x128xf32>
    %c4_52 = arith.constant 4 : index
    %c0_53 = arith.constant 0 : index
    %95 = vector.load %arg5[%c4_52, %c0_53] : memref<12x128xf32, #tpu.memory_space<vmem>>, vector<8x128xf32>
    %96 = tpu.concatenate %93, %94, %95 in 1 : vector<8x128xf32>, vector<8x128xf32>, vector<8x128xf32> -> vector<8x384xf32>
    %c1_54 = arith.constant 1 : index
    %c0_55 = arith.constant 0 : index
    %c0_56 = arith.constant 0 : index
    %97 = vector.load %arg3[%c1_54, %c0_55, %c0_56] : memref<6x384x128xf32, #tpu.memory_space<vmem>>, vector<1x384x128xf32>
    %98 = vector.shape_cast %97 : vector<1x384x128xf32> to vector<384x128xf32>
    %cst_57 = arith.constant dense<0.000000e+00> : vector<8x128xf32>
    %99 = tpu.matmul %96, %98, %cst_57 {dimension_numbers = #tpu.dot_dimension_numbers<[1], [0], [0], [1], [0, 0, 1, 1], [], []>} : vector<8x384xf32>, vector<384x128xf32>, vector<8x128xf32> -> vector<8x128xf32>
    %cst_58 = arith.constant 0.000000e+00 : f32
    %100 = vector.broadcast %cst_58 : f32 to vector<8x128xf32>
    %101 = arith.maximumf %99, %100 : vector<8x128xf32>
    %102 = arith.addf %101, %58 : vector<8x128xf32>
    %cst_59 = arith.constant dense<0.000000e+00> : vector<128xf32>
    %103 = vector.multi_reduction <add>, %102, %cst_59 [0] : vector<8x128xf32> to vector<128xf32>
    %104 = vector.shape_cast %103 : vector<128xf32> to vector<1x128xf32>
    %c32_i32_60 = arith.constant 32 : i32
    %105 = tpu.dynamic_rotate %104 by %c32_i32_60 dim 1 : vector<1x128xf32>, i32 -> vector<1x128xf32>
    %106 = arith.addf %104, %105 : vector<1x128xf32>
    %c64_i32_61 = arith.constant 64 : i32
    %107 = tpu.dynamic_rotate %106 by %c64_i32_61 dim 1 : vector<1x128xf32>, i32 -> vector<1x128xf32>
    %108 = arith.addf %106, %107 : vector<1x128xf32>
    %cst_62 = arith.constant 3.125000e-02 : f32
    %109 = vector.broadcast %cst_62 : f32 to vector<1x128xf32>
    %110 = arith.mulf %108, %109 : vector<1x128xf32>
    %111 = vector.broadcast %110 : vector<1x128xf32> to vector<8x128xf32>
    %112 = arith.subf %102, %111 : vector<8x128xf32>
    %113 = arith.mulf %112, %112 : vector<8x128xf32>
    %cst_63 = arith.constant dense<0.000000e+00> : vector<128xf32>
    %114 = vector.multi_reduction <add>, %113, %cst_63 [0] : vector<8x128xf32> to vector<128xf32>
    %115 = vector.shape_cast %114 : vector<128xf32> to vector<1x128xf32>
    %c32_i32_64 = arith.constant 32 : i32
    %116 = tpu.dynamic_rotate %115 by %c32_i32_64 dim 1 : vector<1x128xf32>, i32 -> vector<1x128xf32>
    %117 = arith.addf %115, %116 : vector<1x128xf32>
    %c64_i32_65 = arith.constant 64 : i32
    %118 = tpu.dynamic_rotate %117 by %c64_i32_65 dim 1 : vector<1x128xf32>, i32 -> vector<1x128xf32>
    %119 = arith.addf %117, %118 : vector<1x128xf32>
    %cst_66 = arith.constant 3.125000e-02 : f32
    %120 = vector.broadcast %cst_66 : f32 to vector<1x128xf32>
    %121 = arith.mulf %119, %120 : vector<1x128xf32>
    %cst_67 = arith.constant 9.99999974E-6 : f32
    %122 = vector.broadcast %cst_67 : f32 to vector<1x128xf32>
    %123 = arith.addf %121, %122 : vector<1x128xf32>
    %124 = math.rsqrt %123 : vector<1x128xf32>
    %125 = vector.broadcast %124 : vector<1x128xf32> to vector<8x128xf32>
    %126 = arith.mulf %112, %125 : vector<8x128xf32>
    %c2_68 = arith.constant 2 : index
    %c0_69 = arith.constant 0 : index
    %127 = vector.load %arg5[%c2_68, %c0_69] : memref<12x128xf32, #tpu.memory_space<vmem>>, vector<8x128xf32>
    tpu.vector_store %arg5[%c2_68, %c0_69], %126 {strides = array<i32>} : memref<12x128xf32, #tpu.memory_space<vmem>>, vector<8x128xf32>,
    %c0_70 = arith.constant 0 : index
    %c0_71 = arith.constant 0 : index
    %128 = vector.load %arg5[%c0_70, %c0_71] : memref<12x128xf32, #tpu.memory_space<vmem>>, vector<8x128xf32>
    %c2_72 = arith.constant 2 : index
    %c0_73 = arith.constant 0 : index
    %129 = vector.load %arg5[%c2_72, %c0_73] : memref<12x128xf32, #tpu.memory_space<vmem>>, vector<8x128xf32>
    %c4_74 = arith.constant 4 : index
    %c0_75 = arith.constant 0 : index
    %130 = vector.load %arg5[%c4_74, %c0_75] : memref<12x128xf32, #tpu.memory_space<vmem>>, vector<8x128xf32>
    %131 = tpu.concatenate %128, %129, %130 in 1 : vector<8x128xf32>, vector<8x128xf32>, vector<8x128xf32> -> vector<8x384xf32>
    %c2_76 = arith.constant 2 : index
    %c0_77 = arith.constant 0 : index
    %c0_78 = arith.constant 0 : index
    %132 = vector.load %arg3[%c2_76, %c0_77, %c0_78] : memref<6x384x128xf32, #tpu.memory_space<vmem>>, vector<1x384x128xf32>
    %133 = vector.shape_cast %132 : vector<1x384x128xf32> to vector<384x128xf32>
    %cst_79 = arith.constant dense<0.000000e+00> : vector<8x128xf32>
    %134 = tpu.matmul %131, %133, %cst_79 {dimension_numbers = #tpu.dot_dimension_numbers<[1], [0], [0], [1], [0, 0, 1, 1], [], []>} : vector<8x384xf32>, vector<384x128xf32>, vector<8x128xf32> -> vector<8x128xf32>
    %cst_80 = arith.constant 0.000000e+00 : f32
    %135 = vector.broadcast %cst_80 : f32 to vector<8x128xf32>
    %136 = arith.maximumf %134, %135 : vector<8x128xf32>
    %cst_81 = arith.constant dense<0.000000e+00> : vector<128xf32>
    %137 = vector.multi_reduction <add>, %136, %cst_81 [0] : vector<8x128xf32> to vector<128xf32>
    %138 = vector.shape_cast %137 : vector<128xf32> to vector<1x128xf32>
    %c32_i32_82 = arith.constant 32 : i32
    %139 = tpu.dynamic_rotate %138 by %c32_i32_82 dim 1 : vector<1x128xf32>, i32 -> vector<1x128xf32>
    %140 = arith.addf %138, %139 : vector<1x128xf32>
    %c64_i32_83 = arith.constant 64 : i32
    %141 = tpu.dynamic_rotate %140 by %c64_i32_83 dim 1 : vector<1x128xf32>, i32 -> vector<1x128xf32>
    %142 = arith.addf %140, %141 : vector<1x128xf32>
    %cst_84 = arith.constant 3.125000e-02 : f32
    %143 = vector.broadcast %cst_84 : f32 to vector<1x128xf32>
    %144 = arith.mulf %142, %143 : vector<1x128xf32>
    %145 = vector.broadcast %144 : vector<1x128xf32> to vector<8x128xf32>
    %146 = arith.subf %136, %145 : vector<8x128xf32>
    %147 = arith.mulf %146, %146 : vector<8x128xf32>
    %cst_85 = arith.constant dense<0.000000e+00> : vector<128xf32>
    %148 = vector.multi_reduction <add>, %147, %cst_85 [0] : vector<8x128xf32> to vector<128xf32>
    %149 = vector.shape_cast %148 : vector<128xf32> to vector<1x128xf32>
    %c32_i32_86 = arith.constant 32 : i32
    %150 = tpu.dynamic_rotate %149 by %c32_i32_86 dim 1 : vector<1x128xf32>, i32 -> vector<1x128xf32>
    %151 = arith.addf %149, %150 : vector<1x128xf32>
    %c64_i32_87 = arith.constant 64 : i32
    %152 = tpu.dynamic_rotate %151 by %c64_i32_87 dim 1 : vector<1x128xf32>, i32 -> vector<1x128xf32>
    %153 = arith.addf %151, %152 : vector<1x128xf32>
    %cst_88 = arith.constant 3.125000e-02 : f32
    %154 = vector.broadcast %cst_88 : f32 to vector<1x128xf32>
    %155 = arith.mulf %153, %154 : vector<1x128xf32>
    %cst_89 = arith.constant 9.99999974E-6 : f32
    %156 = vector.broadcast %cst_89 : f32 to vector<1x128xf32>
    %157 = arith.addf %155, %156 : vector<1x128xf32>
    %158 = math.rsqrt %157 : vector<1x128xf32>
    %159 = vector.broadcast %158 : vector<1x128xf32> to vector<8x128xf32>
    %160 = arith.mulf %146, %159 : vector<8x128xf32>
    %c2_90 = arith.constant 2 : index
    %c0_91 = arith.constant 0 : index
    %161 = vector.load %arg5[%c2_90, %c0_91] : memref<12x128xf32, #tpu.memory_space<vmem>>, vector<8x128xf32>
    tpu.vector_store %arg5[%c2_90, %c0_91], %160 {strides = array<i32>} : memref<12x128xf32, #tpu.memory_space<vmem>>, vector<8x128xf32>,
    %c0_92 = arith.constant 0 : index
    %c0_93 = arith.constant 0 : index
    %162 = vector.load %arg5[%c0_92, %c0_93] : memref<12x128xf32, #tpu.memory_space<vmem>>, vector<8x128xf32>
    %c2_94 = arith.constant 2 : index
    %c0_95 = arith.constant 0 : index
    %163 = vector.load %arg5[%c2_94, %c0_95] : memref<12x128xf32, #tpu.memory_space<vmem>>, vector<8x128xf32>
    %c4_96 = arith.constant 4 : index
    %c0_97 = arith.constant 0 : index
    %164 = vector.load %arg5[%c4_96, %c0_97] : memref<12x128xf32, #tpu.memory_space<vmem>>, vector<8x128xf32>
    %165 = tpu.concatenate %162, %163, %164 in 1 : vector<8x128xf32>, vector<8x128xf32>, vector<8x128xf32> -> vector<8x384xf32>
    %c3 = arith.constant 3 : index
    %c0_98 = arith.constant 0 : index
    %c0_99 = arith.constant 0 : index
    %166 = vector.load %arg3[%c3, %c0_98, %c0_99] : memref<6x384x128xf32, #tpu.memory_space<vmem>>, vector<1x384x128xf32>
    %167 = vector.shape_cast %166 : vector<1x384x128xf32> to vector<384x128xf32>
    %cst_100 = arith.constant dense<0.000000e+00> : vector<8x128xf32>
    %168 = tpu.matmul %165, %167, %cst_100 {dimension_numbers = #tpu.dot_dimension_numbers<[1], [0], [0], [1], [0, 0, 1, 1], [], []>} : vector<8x384xf32>, vector<384x128xf32>, vector<8x128xf32> -> vector<8x128xf32>
    %cst_101 = arith.constant 0.000000e+00 : f32
    %169 = vector.broadcast %cst_101 : f32 to vector<8x128xf32>
    %170 = arith.maximumf %168, %169 : vector<8x128xf32>
    %171 = arith.addf %170, %102 : vector<8x128xf32>
    %cst_102 = arith.constant dense<0.000000e+00> : vector<128xf32>
    %172 = vector.multi_reduction <add>, %171, %cst_102 [0] : vector<8x128xf32> to vector<128xf32>
    %173 = vector.shape_cast %172 : vector<128xf32> to vector<1x128xf32>
    %c32_i32_103 = arith.constant 32 : i32
    %174 = tpu.dynamic_rotate %173 by %c32_i32_103 dim 1 : vector<1x128xf32>, i32 -> vector<1x128xf32>
    %175 = arith.addf %173, %174 : vector<1x128xf32>
    %c64_i32_104 = arith.constant 64 : i32
    %176 = tpu.dynamic_rotate %175 by %c64_i32_104 dim 1 : vector<1x128xf32>, i32 -> vector<1x128xf32>
    %177 = arith.addf %175, %176 : vector<1x128xf32>
    %cst_105 = arith.constant 3.125000e-02 : f32
    %178 = vector.broadcast %cst_105 : f32 to vector<1x128xf32>
    %179 = arith.mulf %177, %178 : vector<1x128xf32>
    %180 = vector.broadcast %179 : vector<1x128xf32> to vector<8x128xf32>
    %181 = arith.subf %171, %180 : vector<8x128xf32>
    %182 = arith.mulf %181, %181 : vector<8x128xf32>
    %cst_106 = arith.constant dense<0.000000e+00> : vector<128xf32>
    %183 = vector.multi_reduction <add>, %182, %cst_106 [0] : vector<8x128xf32> to vector<128xf32>
    %184 = vector.shape_cast %183 : vector<128xf32> to vector<1x128xf32>
    %c32_i32_107 = arith.constant 32 : i32
    %185 = tpu.dynamic_rotate %184 by %c32_i32_107 dim 1 : vector<1x128xf32>, i32 -> vector<1x128xf32>
    %186 = arith.addf %184, %185 : vector<1x128xf32>
    %c64_i32_108 = arith.constant 64 : i32
    %187 = tpu.dynamic_rotate %186 by %c64_i32_108 dim 1 : vector<1x128xf32>, i32 -> vector<1x128xf32>
    %188 = arith.addf %186, %187 : vector<1x128xf32>
    %cst_109 = arith.constant 3.125000e-02 : f32
    %189 = vector.broadcast %cst_109 : f32 to vector<1x128xf32>
    %190 = arith.mulf %188, %189 : vector<1x128xf32>
    %cst_110 = arith.constant 9.99999974E-6 : f32
    %191 = vector.broadcast %cst_110 : f32 to vector<1x128xf32>
    %192 = arith.addf %190, %191 : vector<1x128xf32>
    %193 = math.rsqrt %192 : vector<1x128xf32>
    %194 = vector.broadcast %193 : vector<1x128xf32> to vector<8x128xf32>
    %195 = arith.mulf %181, %194 : vector<8x128xf32>
    %c2_111 = arith.constant 2 : index
    %c0_112 = arith.constant 0 : index
    %196 = vector.load %arg5[%c2_111, %c0_112] : memref<12x128xf32, #tpu.memory_space<vmem>>, vector<8x128xf32>
    tpu.vector_store %arg5[%c2_111, %c0_112], %195 {strides = array<i32>} : memref<12x128xf32, #tpu.memory_space<vmem>>, vector<8x128xf32>,
    %c0_113 = arith.constant 0 : index
    %c0_114 = arith.constant 0 : index
    %197 = vector.load %arg5[%c0_113, %c0_114] : memref<12x128xf32, #tpu.memory_space<vmem>>, vector<8x128xf32>
    %c2_115 = arith.constant 2 : index
    %c0_116 = arith.constant 0 : index
    %198 = vector.load %arg5[%c2_115, %c0_116] : memref<12x128xf32, #tpu.memory_space<vmem>>, vector<8x128xf32>
    %c4_117 = arith.constant 4 : index
    %c0_118 = arith.constant 0 : index
    %199 = vector.load %arg5[%c4_117, %c0_118] : memref<12x128xf32, #tpu.memory_space<vmem>>, vector<8x128xf32>
    %200 = tpu.concatenate %197, %198, %199 in 1 : vector<8x128xf32>, vector<8x128xf32>, vector<8x128xf32> -> vector<8x384xf32>
    %c4_119 = arith.constant 4 : index
    %c0_120 = arith.constant 0 : index
    %c0_121 = arith.constant 0 : index
    %201 = vector.load %arg3[%c4_119, %c0_120, %c0_121] : memref<6x384x128xf32, #tpu.memory_space<vmem>>, vector<1x384x128xf32>
    %202 = vector.shape_cast %201 : vector<1x384x128xf32> to vector<384x128xf32>
    %cst_122 = arith.constant dense<0.000000e+00> : vector<8x128xf32>
    %203 = tpu.matmul %200, %202, %cst_122 {dimension_numbers = #tpu.dot_dimension_numbers<[1], [0], [0], [1], [0, 0, 1, 1], [], []>} : vector<8x384xf32>, vector<384x128xf32>, vector<8x128xf32> -> vector<8x128xf32>
    %cst_123 = arith.constant 0.000000e+00 : f32
    %204 = vector.broadcast %cst_123 : f32 to vector<8x128xf32>
    %205 = arith.maximumf %203, %204 : vector<8x128xf32>
    %cst_124 = arith.constant dense<0.000000e+00> : vector<128xf32>
    %206 = vector.multi_reduction <add>, %205, %cst_124 [0] : vector<8x128xf32> to vector<128xf32>
    %207 = vector.shape_cast %206 : vector<128xf32> to vector<1x128xf32>
    %c32_i32_125 = arith.constant 32 : i32
    %208 = tpu.dynamic_rotate %207 by %c32_i32_125 dim 1 : vector<1x128xf32>, i32 -> vector<1x128xf32>
    %209 = arith.addf %207, %208 : vector<1x128xf32>
    %c64_i32_126 = arith.constant 64 : i32
    %210 = tpu.dynamic_rotate %209 by %c64_i32_126 dim 1 : vector<1x128xf32>, i32 -> vector<1x128xf32>
    %211 = arith.addf %209, %210 : vector<1x128xf32>
    %cst_127 = arith.constant 3.125000e-02 : f32
    %212 = vector.broadcast %cst_127 : f32 to vector<1x128xf32>
    %213 = arith.mulf %211, %212 : vector<1x128xf32>
    %214 = vector.broadcast %213 : vector<1x128xf32> to vector<8x128xf32>
    %215 = arith.subf %205, %214 : vector<8x128xf32>
    %216 = arith.mulf %215, %215 : vector<8x128xf32>
    %cst_128 = arith.constant dense<0.000000e+00> : vector<128xf32>
    %217 = vector.multi_reduction <add>, %216, %cst_128 [0] : vector<8x128xf32> to vector<128xf32>
    %218 = vector.shape_cast %217 : vector<128xf32> to vector<1x128xf32>
    %c32_i32_129 = arith.constant 32 : i32
    %219 = tpu.dynamic_rotate %218 by %c32_i32_129 dim 1 : vector<1x128xf32>, i32 -> vector<1x128xf32>
    %220 = arith.addf %218, %219 : vector<1x128xf32>
    %c64_i32_130 = arith.constant 64 : i32
    %221 = tpu.dynamic_rotate %220 by %c64_i32_130 dim 1 : vector<1x128xf32>, i32 -> vector<1x128xf32>
    %222 = arith.addf %220, %221 : vector<1x128xf32>
    %cst_131 = arith.constant 3.125000e-02 : f32
    %223 = vector.broadcast %cst_131 : f32 to vector<1x128xf32>
    %224 = arith.mulf %222, %223 : vector<1x128xf32>
    %cst_132 = arith.constant 9.99999974E-6 : f32
    %225 = vector.broadcast %cst_132 : f32 to vector<1x128xf32>
    %226 = arith.addf %224, %225 : vector<1x128xf32>
    %227 = math.rsqrt %226 : vector<1x128xf32>
    %228 = vector.broadcast %227 : vector<1x128xf32> to vector<8x128xf32>
    %229 = arith.mulf %215, %228 : vector<8x128xf32>
    %c2_133 = arith.constant 2 : index
    %c0_134 = arith.constant 0 : index
    %230 = vector.load %arg5[%c2_133, %c0_134] : memref<12x128xf32, #tpu.memory_space<vmem>>, vector<8x128xf32>
    tpu.vector_store %arg5[%c2_133, %c0_134], %229 {strides = array<i32>} : memref<12x128xf32, #tpu.memory_space<vmem>>, vector<8x128xf32>,
    %c0_135 = arith.constant 0 : index
    %c0_136 = arith.constant 0 : index
    %231 = vector.load %arg5[%c0_135, %c0_136] : memref<12x128xf32, #tpu.memory_space<vmem>>, vector<8x128xf32>
    %c2_137 = arith.constant 2 : index
    %c0_138 = arith.constant 0 : index
    %232 = vector.load %arg5[%c2_137, %c0_138] : memref<12x128xf32, #tpu.memory_space<vmem>>, vector<8x128xf32>
    %c4_139 = arith.constant 4 : index
    %c0_140 = arith.constant 0 : index
    %233 = vector.load %arg5[%c4_139, %c0_140] : memref<12x128xf32, #tpu.memory_space<vmem>>, vector<8x128xf32>
    %234 = tpu.concatenate %231, %232, %233 in 1 : vector<8x128xf32>, vector<8x128xf32>, vector<8x128xf32> -> vector<8x384xf32>
    %c5 = arith.constant 5 : index
    %c0_141 = arith.constant 0 : index
    %c0_142 = arith.constant 0 : index
    %235 = vector.load %arg3[%c5, %c0_141, %c0_142] : memref<6x384x128xf32, #tpu.memory_space<vmem>>, vector<1x384x128xf32>
    %236 = vector.shape_cast %235 : vector<1x384x128xf32> to vector<384x128xf32>
    %cst_143 = arith.constant dense<0.000000e+00> : vector<8x128xf32>
    %237 = tpu.matmul %234, %236, %cst_143 {dimension_numbers = #tpu.dot_dimension_numbers<[1], [0], [0], [1], [0, 0, 1, 1], [], []>} : vector<8x384xf32>, vector<384x128xf32>, vector<8x128xf32> -> vector<8x128xf32>
    %cst_144 = arith.constant 0.000000e+00 : f32
    %238 = vector.broadcast %cst_144 : f32 to vector<8x128xf32>
    %239 = arith.maximumf %237, %238 : vector<8x128xf32>
    %240 = arith.addf %239, %171 : vector<8x128xf32>
    %cst_145 = arith.constant dense<0.000000e+00> : vector<128xf32>
    %241 = vector.multi_reduction <add>, %240, %cst_145 [0] : vector<8x128xf32> to vector<128xf32>
    %242 = vector.shape_cast %241 : vector<128xf32> to vector<1x128xf32>
    %c32_i32_146 = arith.constant 32 : i32
    %243 = tpu.dynamic_rotate %242 by %c32_i32_146 dim 1 : vector<1x128xf32>, i32 -> vector<1x128xf32>
    %244 = arith.addf %242, %243 : vector<1x128xf32>
    %c64_i32_147 = arith.constant 64 : i32
    %245 = tpu.dynamic_rotate %244 by %c64_i32_147 dim 1 : vector<1x128xf32>, i32 -> vector<1x128xf32>
    %246 = arith.addf %244, %245 : vector<1x128xf32>
    %cst_148 = arith.constant 3.125000e-02 : f32
    %247 = vector.broadcast %cst_148 : f32 to vector<1x128xf32>
    %248 = arith.mulf %246, %247 : vector<1x128xf32>
    %249 = vector.broadcast %248 : vector<1x128xf32> to vector<8x128xf32>
    %250 = arith.subf %240, %249 : vector<8x128xf32>
    %251 = arith.mulf %250, %250 : vector<8x128xf32>
    %cst_149 = arith.constant dense<0.000000e+00> : vector<128xf32>
    %252 = vector.multi_reduction <add>, %251, %cst_149 [0] : vector<8x128xf32> to vector<128xf32>
    %253 = vector.shape_cast %252 : vector<128xf32> to vector<1x128xf32>
    %c32_i32_150 = arith.constant 32 : i32
    %254 = tpu.dynamic_rotate %253 by %c32_i32_150 dim 1 : vector<1x128xf32>, i32 -> vector<1x128xf32>
    %255 = arith.addf %253, %254 : vector<1x128xf32>
    %c64_i32_151 = arith.constant 64 : i32
    %256 = tpu.dynamic_rotate %255 by %c64_i32_151 dim 1 : vector<1x128xf32>, i32 -> vector<1x128xf32>
    %257 = arith.addf %255, %256 : vector<1x128xf32>
    %cst_152 = arith.constant 3.125000e-02 : f32
    %258 = vector.broadcast %cst_152 : f32 to vector<1x128xf32>
    %259 = arith.mulf %257, %258 : vector<1x128xf32>
    %cst_153 = arith.constant 9.99999974E-6 : f32
    %260 = vector.broadcast %cst_153 : f32 to vector<1x128xf32>
    %261 = arith.addf %259, %260 : vector<1x128xf32>
    %262 = math.rsqrt %261 : vector<1x128xf32>
    %263 = vector.broadcast %262 : vector<1x128xf32> to vector<8x128xf32>
    %264 = arith.mulf %250, %263 : vector<8x128xf32>
    %265 = vector.extract_strided_slice %264 {offsets = [0, 0], sizes = [2, 128], strides = [1, 1]} : vector<8x128xf32> to vector<2x128xf32>
    %266 = vector.extract_strided_slice %264 {offsets = [2, 0], sizes = [2, 128], strides = [1, 1]} : vector<8x128xf32> to vector<2x128xf32>
    %267 = arith.addf %265, %266 : vector<2x128xf32>
    %268 = vector.extract_strided_slice %264 {offsets = [4, 0], sizes = [2, 128], strides = [1, 1]} : vector<8x128xf32> to vector<2x128xf32>
    %269 = arith.addf %267, %268 : vector<2x128xf32>
    %270 = vector.extract_strided_slice %264 {offsets = [6, 0], sizes = [2, 128], strides = [1, 1]} : vector<8x128xf32> to vector<2x128xf32>
    %271 = arith.addf %269, %270 : vector<2x128xf32>
    %272 = vector.extract_strided_slice %271 {offsets = [0, 0], sizes = [2, 32], strides = [1, 1]} : vector<2x128xf32> to vector<2x32xf32>
    %273 = vector.extract_strided_slice %271 {offsets = [0, 32], sizes = [2, 32], strides = [1, 1]} : vector<2x128xf32> to vector<2x32xf32>
    %274 = arith.addf %272, %273 : vector<2x32xf32>
    %275 = vector.extract_strided_slice %271 {offsets = [0, 64], sizes = [2, 32], strides = [1, 1]} : vector<2x128xf32> to vector<2x32xf32>
    %276 = arith.addf %274, %275 : vector<2x32xf32>
    %277 = vector.extract_strided_slice %271 {offsets = [0, 96], sizes = [2, 32], strides = [1, 1]} : vector<2x128xf32> to vector<2x32xf32>
    %278 = arith.addf %276, %277 : vector<2x32xf32>
    %cst_154 = arith.constant 6.250000e-02 : f32
    %279 = vector.broadcast %cst_154 : f32 to vector<2x32xf32>
    %280 = arith.mulf %278, %279 : vector<2x32xf32>
    %281 = arith.mulf %280, %280 : vector<2x32xf32>
    %cst_155 = arith.constant dense<0.000000e+00> : vector<2xf32>
    %282 = vector.multi_reduction <add>, %281, %cst_155 [1] : vector<2x32xf32> to vector<2xf32>
    %283 = vector.shape_cast %282 : vector<2xf32> to vector<2x1xf32>
    %cst_156 = arith.constant 1.000000e-24 : f32
    %284 = vector.broadcast %cst_156 : f32 to vector<2x1xf32>
    %285 = arith.maximumf %283, %284 : vector<2x1xf32>
    %286 = math.rsqrt %285 : vector<2x1xf32>
    %287 = vector.broadcast %286 : vector<2x1xf32> to vector<2x32xf32>
    %288 = arith.mulf %280, %287 : vector<2x32xf32>
    %c0_157 = arith.constant 0 : index
    %c0_158 = arith.constant 0 : index
    %c0_159 = arith.constant 0 : index
    %289 = vector.load %arg4[%c0_157, %c0_158, %c0_159] : memref<1x2x32xf32, #tpu.memory_space<vmem>>, vector<1x2x32xf32>
    %290 = vector.shape_cast %289 : vector<1x2x32xf32> to vector<2x32xf32>
    %291 = vector.shape_cast %288 : vector<2x32xf32> to vector<1x2x32xf32>
    tpu.vector_store %arg4[%c0_157, %c0_158, %c0_159], %291 {strides = array<i32>} : memref<1x2x32xf32, #tpu.memory_space<vmem>>, vector<1x2x32xf32>,
    return
  }
  func.func @transform_0(%arg0: i32) -> (i32, i32, i32) {
    %c0_i32 = arith.constant 0 : i32
    %c0_i32_0 = arith.constant 0 : i32
    %c0_i32_1 = arith.constant 0 : i32
    return %arg0, %c0_i32, %c0_i32_0 : i32, i32, i32
  }
  func.func @transform_1(%arg0: i32) -> (i32, i32, i32) {
    %c0_i32 = arith.constant 0 : i32
    %c0_i32_0 = arith.constant 0 : i32
    %c0_i32_1 = arith.constant 0 : i32
    %c0_i32_2 = arith.constant 0 : i32
    return %c0_i32, %c0_i32_0, %c0_i32_1 : i32, i32, i32
  }
  func.func @transform_2(%arg0: i32) -> (i32, i32, i32) {
    %c0_i32 = arith.constant 0 : i32
    %c0_i32_0 = arith.constant 0 : i32
    %c0_i32_1 = arith.constant 0 : i32
    %c0_i32_2 = arith.constant 0 : i32
    return %c0_i32, %c0_i32_0, %c0_i32_1 : i32, i32, i32
  }
  func.func @transform_3(%arg0: i32) -> (i32, i32, i32) {
    %c0_i32 = arith.constant 0 : i32
    %c0_i32_0 = arith.constant 0 : i32
    %c0_i32_1 = arith.constant 0 : i32
    return %arg0, %c0_i32, %c0_i32_0 : i32, i32, i32
  }
}

</mosaic_0001>

<llo_original>
// kernel: triplet_tcresnet8_forward.1
$region0: #{triplet_tcresnet8_forward.1}
  #allocation0 [shape = 'u32[]', space=smem, size = 0x4, offset = 0x4, fixed_abs, tag = 'smem constant byte address 0x4 - core index']
  #allocation1 [shape = 'u32[144,128]{1,0:T(1,128)}', space=vmem, size = 0x12000, scoped, tag = 'internal scratch']
  #allocation2 [shape = 'f32[12,128]{1,0:T(8,128)}', space=vmem, size = 0x2000, scoped, tag = 'scratch operand']
  %s0 = inlined_call_operand.vmem [shape: f32[1,36,12], index: 0, kind: input, shape index: {}]
  %s1 = inlined_call_operand.hbm [shape: f32[3,12,384], index: 1, kind: input, shape index: {}]
  %s2 = inlined_call_operand.hbm [shape: f32[6,384,128], index: 2, kind: input, shape index: {}]
  %s3 = inlined_call_operand.hbm [shape: f32[1,2,32], index: 3, kind: output, shape index: {}]
  %s4 = sld [smem:[#allocation0]]
  $region30: #{triplet_tcresnet8_forward.1} parent=0
    _
  %s6 = ssub.s32 1, %s4
  %s7 = scalar_select 0, %s6, %s4
  $region1: #{triplet_tcresnet8_forward.1} parent=0
    #allocation3 [shape = 'u8[73728]{0}', space=vmem, size = 0x12000, scoped, tag = 'input window, operand 1, single buffered']
    #allocation4 [shape = 's32[1]{0}', space=sflag, size = 0x4, scoped, tag = 'scoped memory for triplet_tcresnet8_forward.1']
    #allocation5 [shape = 's32[1]{0}', space=sflag, size = 0x4, scoped, tag = 'scoped memory for triplet_tcresnet8_forward.1']
    #allocation6 [shape = 'u8[1179648]{0}', space=vmem, size = 0x120000, scoped, tag = 'input window, operand 2, single buffered']
    #allocation7 [shape = 's32[1]{0}', space=sflag, size = 0x4, scoped, tag = 'scoped memory for triplet_tcresnet8_forward.1']
    #allocation8 [shape = 'u8[1024]{0}', space=vmem, size = 0x400, scoped, tag = 'output window, operand 0, single buffered']
    %8 = vsyncpa [#allocation4], 0
    %9 = vsyncpa [#allocation7], 0
    %10 = vsyncpa [#allocation5], 0
    // Predicated region
    $region2: #{triplet_tcresnet8_forward.1} parent=1 // pred_check
      _
    $region3: #{triplet_tcresnet8_forward.1} parent=1 // pred_check_branch
      %12 = sbr.rel (0) target = $region5
    $region4: #{triplet_tcresnet8_forward.1} parent=1 // pred_region
      _
    $region5: #{triplet_tcresnet8_forward.1} parent=1 // pred_fallthru
      _
    // Predicated region
    $region6: #{triplet_tcresnet8_forward.1} parent=1 // pred_check
      _
    $region7: #{triplet_tcresnet8_forward.1} parent=1 // pred_check_branch
      %14 = sbr.rel (0) target = $region9
    $region8: #{triplet_tcresnet8_forward.1} parent=1 // pred_region
      %s16 = ssub.s32 2304, 2304
      %17 = vsyncadd [#allocation4], %s16
      %s18 = sshll.u32 [#allocation3], 4
      %s19 = int_to_ptr.vmem [resolvable:$true] %s18
      %24 = dma.hbm_to_vmem [thread:$0]  %s1, 2304, %s19, [#allocation4], 384, 384, 24
    $region9: #{triplet_tcresnet8_forward.1} parent=1 // pred_fallthru
      _
    // Predicated region
    $region10: #{triplet_tcresnet8_forward.1} parent=1 // pred_check
      _
    $region11: #{triplet_tcresnet8_forward.1} parent=1 // pred_check_branch
      %26 = sbr.rel (0) target = $region13
    $region12: #{triplet_tcresnet8_forward.1} parent=1 // pred_region
      %s28 = ssub.s32 36864, 36864
      %29 = vsyncadd [#allocation7], %s28
      %s30 = sshll.u32 [#allocation6], 4
      %s31 = int_to_ptr.vmem [resolvable:$true] %s30
      %36 = dma.hbm_to_vmem [thread:$0]  %s2, 36864, %s31, [#allocation7], 128, 128, 8
    $region13: #{triplet_tcresnet8_forward.1} parent=1 // pred_fallthru
      _
    // Predicated region
    $region14: #{triplet_tcresnet8_forward.1} parent=1 // pred_check
      _
    $region15: #{triplet_tcresnet8_forward.1} parent=1 // pred_check_branch
      %38 = sbr.rel (0) target = $region17
    $region16: #{triplet_tcresnet8_forward.1} parent=1 // pred_region
      %39 = dma.done [#allocation4], 2304
    $region17: #{triplet_tcresnet8_forward.1} parent=1 // pred_fallthru
      _
    // Predicated region
    $region18: #{triplet_tcresnet8_forward.1} parent=1 // pred_check
      _
    $region19: #{triplet_tcresnet8_forward.1} parent=1 // pred_check_branch
      %41 = sbr.rel (0) target = $region21
    $region20: #{triplet_tcresnet8_forward.1} parent=1 // pred_region
      %42 = dma.done [#allocation7], 36864
    $region21: #{triplet_tcresnet8_forward.1} parent=1 // pred_fallthru
      _
    %43 = vst [vmem:[#allocation2] sm:$0xff] 0.0
    %44 = vst [vmem:[#allocation2 + $0x8] sm:$0xf] 0.0
    %v45 = vld [vmem:[%s0] sm:$0xff]
    %v46 = vld [vmem:[%s0 + $0x8] sm:$0xff]
    %v47 = vld [vmem:[%s0 + $0x10] sm:$0xff]
    %v48 = vld [vmem:[%s0 + $0x18] sm:$0xff]
    %v49 = vld [vmem:[#allocation3] sm:$0xff]
    %v50 = vld [vmem:[#allocation3 + $0x8] sm:$0xff]
    %v51 = vld [vmem:[#allocation3 + $0x10] sm:$0xff]
    %v52 = vld [vmem:[#allocation3 + $0x18] sm:$0xf]
    %v53 = vld [vmem:[#allocation3 + $0x20] sm:$0xf]
    %v54 = vld [vmem:[#allocation3 + $0x28] sm:$0xf]
    %v55 = vld [vmem:[%s0 + $0x2] sm:$0xff]
    %v56 = vld [vmem:[%s0 + $0xa] sm:$0xff]
    %v57 = vld [vmem:[%s0 + $0x12] sm:$0xff]
    %v58 = vld [vmem:[%s0 + $0x1a] sm:$0xff]
    %s59 = scalar_lea.vmem [#allocation3], 48
    %v60 = vld [vmem:[%s59] sm:$0xff]
    %v61 = vld [vmem:[%s59 + $0x8] sm:$0xff]
    %v62 = vld [vmem:[%s59 + $0x10] sm:$0xff]
    %v63 = vld [vmem:[%s59 + $0x18] sm:$0xf]
    %v64 = vld [vmem:[%s59 + $0x20] sm:$0xf]
    %v65 = vld [vmem:[%s59 + $0x28] sm:$0xf]
    %vm66 = vcmask 97280
    %v68 = vsel %vm66, %v55, 0
    %v71 = vsel %vm66, %v56, 0
    %v74 = vsel %vm66, %v57, 0
    %v77 = vsel %vm66, %v58, 0
    %vm79 = vcmask 1043456
    %v81 = vsel %vm79, %v63, 0
    %v84 = vsel %vm79, %v64, 0
    %v87 = vsel %vm79, %v65, 0
    %89 = vmatprep.subr.mxu0 %v61
    %90 = vmatpush1.msra.mxu0 %v60
    %91 = vmatprep.subr.mxu0 %v84
    %92 = vmatpush1.msra.mxu0 %v81
    %93 = vmatprep.subr.mxu0 0.0
    %94 = vmatpush1.msra.mxu0 0.0
    %95 = vmatprep.subr.mxu0 0.0
    %96 = vmatpush1.msra.mxu0 0.0
    %97 = vmatprep.subr.mxu0 0.0
    %98 = vmatpush1.msra.mxu0 0.0
    %99 = vmatprep.subr.mxu0 0.0
    %100 = vmatpush1.msra.mxu0 0.0
    %101 = vmatprep.subr.mxu0 0.0
    %102 = vmatpush1.msra.mxu0 0.0
    %103 = vmatprep.subr.mxu0 0.0
    %104 = vmatpush1.msra.mxu0 0.0
    %105 = vmatprep.subr.mxu0 0.0
    %106 = vmatpush1.msra.mxu0 0.0
    %107 = vmatprep.subr.mxu0 0.0
    %108 = vmatpush1.msra.mxu0 0.0
    %109 = vmatprep.subr.mxu0 0.0
    %110 = vmatpush1.msra.mxu0 0.0
    %111 = vmatprep.subr.mxu0 0.0
    %112 = vmatpush1.msra.mxu0 0.0
    %113 = vmatprep.subr.mxu0 0.0
    %114 = vmatpush1.msra.mxu0 0.0
    %115 = vmatprep.subr.mxu0 0.0
    %116 = vmatpush1.msra.mxu0 0.0
    %117 = vmatprep.subr.mxu0 0.0
    %118 = vmatpush1.msra.mxu0 0.0
    %119 = vmatprep.subr.mxu0 0.0
    %120 = vmatpush1.msra.mxu0 0.0
    %121 = vmatprep.subr.mxu0 0.0
    %122 = vmatpush1.msra.mxu0 0.0
    %123 = vmatprep.subr.mxu0 0.0
    %124 = vmatpush1.msra.mxu0 0.0
    %125 = vmatprep.subr.mxu0 0.0
    %126 = vmatpush1.msra.mxu0 0.0
    %127 = vmatprep.subr.mxu0 0.0
    %128 = vmatpush1.msra.mxu0 0.0
    %129 = vmatprep.subr.mxu0 0.0
    %130 = vmatpush1.msra.mxu0 0.0
    %131 = vmatprep.subr.mxu0 0.0
    %132 = vmatpush1.msra.mxu0 0.0
    %133 = vmatprep.subr.mxu0 0.0
    %134 = vmatpush1.msra.mxu0 0.0
    %135 = vmatprep.subr.mxu0 0.0
    %136 = vmatpush1.msra.mxu0 0.0
    %137 = vmatprep.subr.mxu0 0.0
    %138 = vmatpush1.msra.mxu0 0.0
    %139 = vmatprep.subr.mxu0 0.0
    %140 = vmatpush1.msra.mxu0 0.0
    %141 = vmatprep.subr.mxu0 0.0
    %142 = vmatpush1.msra.mxu0 0.0
    %143 = vmatprep.subr.mxu0 0.0
    %144 = vmatpush1.msra.mxu0 0.0
    %145 = vmatprep.subr.mxu0 0.0
    %146 = vmatpush1.msra.mxu0 0.0
    %147 = vmatprep.subr.mxu0 0.0
    %148 = vmatpush1.msra.mxu0 0.0
    %149 = vmatprep.subr.mxu0 0.0
    %150 = vmatpush1.msra.mxu0 0.0
    %151 = vmatprep.subr.mxu0 0.0
    %152 = vmatpush1.msra.mxu0 0.0
    %153 = vmatprep.mubr.f32.mxu0 0.0
    %154 = vmatmul.mubr.f32.gmra.mrb[0].mxu0 %v68
    %v155 = vpop.f32.mrb[0].mxu0
    %v156 = vadd.f32 0.0, %v155
    %v157 = vpop.f32.mrb[0].mxu0
    %v158 = vadd.f32 0.0, %v157
    %159 = vmatprep.mubr.f32.mxu0 0.0
    %160 = vmatmul.mubr.f32.gmra.mrb[0].mxu0 %v71
    %v161 = vpop.f32.mrb[0].mxu0
    %v162 = vadd.f32 0.0, %v161
    %v163 = vpop.f32.mrb[0].mxu0
    %v164 = vadd.f32 0.0, %v163
    %165 = vmatprep.mubr.f32.mxu0 0.0
    %166 = vmatmul.mubr.f32.gmra.mrb[0].mxu0 %v74
    %v167 = vpop.f32.mrb[0].mxu0
    %v168 = vadd.f32 0.0, %v167
    %v169 = vpop.f32.mrb[0].mxu0
    %v170 = vadd.f32 0.0, %v169
    %171 = vmatprep.mubr.f32.mxu0 0.0
    %172 = vmatmul.mubr.f32.gmra.mrb[0].mxu0 %v77
    %v173 = vpop.f32.mrb[0].mxu0
    %v174 = vadd.f32 0.0, %v173
    %v175 = vpop.f32.mrb[0].mxu0
    %v176 = vadd.f32 0.0, %v175
    %177 = vdwg.mxu0
    %178 = vmatprep.subr.mxu0 0.0
    %179 = vmatpush1.msra.mxu0 %v62
    %180 = vmatprep.subr.mxu0 0.0
    %181 = vmatpush1.msra.mxu0 %v87
    %182 = vmatprep.subr.mxu0 0.0
    %183 = vmatpush1.msra.mxu0 0.0
    %184 = vmatprep.subr.mxu0 0.0
    %185 = vmatpush1.msra.mxu0 0.0
    %186 = vmatprep.subr.mxu0 0.0
    %187 = vmatpush1.msra.mxu0 0.0
    %188 = vmatprep.subr.mxu0 0.0
    %189 = vmatpush1.msra.mxu0 0.0
    %190 = vmatprep.subr.mxu0 0.0
    %191 = vmatpush1.msra.mxu0 0.0
    %192 = vmatprep.subr.mxu0 0.0
    %193 = vmatpush1.msra.mxu0 0.0
    %194 = vmatprep.subr.mxu0 0.0
    %195 = vmatpush1.msra.mxu0 0.0
    %196 = vmatprep.subr.mxu0 0.0
    %197 = vmatpush1.msra.mxu0 0.0
    %198 = vmatprep.subr.mxu0 0.0
    %199 = vmatpush1.msra.mxu0 0.0
    %200 = vmatprep.subr.mxu0 0.0
    %201 = vmatpush1.msra.mxu0 0.0
    %202 = vmatprep.subr.mxu0 0.0
    %203 = vmatpush1.msra.mxu0 0.0
    %204 = vmatprep.subr.mxu0 0.0
    %205 = vmatpush1.msra.mxu0 0.0
    %206 = vmatprep.subr.mxu0 0.0
    %207 = vmatpush1.msra.mxu0 0.0
    %208 = vmatprep.subr.mxu0 0.0
    %209 = vmatpush1.msra.mxu0 0.0
    %210 = vmatprep.subr.mxu0 0.0
    %211 = vmatpush1.msra.mxu0 0.0
    %212 = vmatprep.subr.mxu0 0.0
    %213 = vmatpush1.msra.mxu0 0.0
    %214 = vmatprep.subr.mxu0 0.0
    %215 = vmatpush1.msra.mxu0 0.0
    %216 = vmatprep.subr.mxu0 0.0
    %217 = vmatpush1.msra.mxu0 0.0
    %218 = vmatprep.subr.mxu0 0.0
    %219 = vmatpush1.msra.mxu0 0.0
    %220 = vmatprep.subr.mxu0 0.0
    %221 = vmatpush1.msra.mxu0 0.0
    %222 = vmatprep.subr.mxu0 0.0
    %223 = vmatpush1.msra.mxu0 0.0
    %224 = vmatprep.subr.mxu0 0.0
    %225 = vmatpush1.msra.mxu0 0.0
    %226 = vmatprep.subr.mxu0 0.0
    %227 = vmatpush1.msra.mxu0 0.0
    %228 = vmatprep.subr.mxu0 0.0
    %229 = vmatpush1.msra.mxu0 0.0
    %230 = vmatprep.subr.mxu0 0.0
    %231 = vmatpush1.msra.mxu0 0.0
    %232 = vmatprep.subr.mxu0 0.0
    %233 = vmatpush1.msra.mxu0 0.0
    %234 = vmatprep.subr.mxu0 0.0
    %235 = vmatpush1.msra.mxu0 0.0
    %236 = vmatprep.subr.mxu0 0.0
    %237 = vmatpush1.msra.mxu0 0.0
    %238 = vmatprep.subr.mxu0 0.0
    %239 = vmatpush1.msra.mxu0 0.0
    %240 = vmatprep.subr.mxu0 0.0
    %241 = vmatpush1.msra.mxu0 0.0
    %242 = vmatprep.mubr.f32.mxu0 0.0
    %243 = vmatmul.mubr.f32.gmra.mrb[0].mxu0 %v68
    %v244 = vpop.f32.mrb[0].mxu0
    %v245 = vadd.f32 0.0, %v244
    %v246 = vpop.f32.mrb[0].mxu0
    %247 = vmatprep.mubr.f32.mxu0 0.0
    %248 = vmatmul.mubr.f32.gmra.mrb[0].mxu0 %v71
    %v249 = vpop.f32.mrb[0].mxu0
    %v250 = vadd.f32 0.0, %v249
    %v251 = vpop.f32.mrb[0].mxu0
    %252 = vmatprep.mubr.f32.mxu0 0.0
    %253 = vmatmul.mubr.f32.gmra.mrb[0].mxu0 %v74
    %v254 = vpop.f32.mrb[0].mxu0
    %v255 = vadd.f32 0.0, %v254
    %v256 = vpop.f32.mrb[0].mxu0
    %257 = vmatprep.mubr.f32.mxu0 0.0
    %258 = vmatmul.mubr.f32.gmra.mrb[0].mxu0 %v77
    %v259 = vpop.f32.mrb[0].mxu0
    %v260 = vadd.f32 0.0, %v259
    %v261 = vpop.f32.mrb[0].mxu0
    %262 = vdwg.mxu0
    %v264 = vsel %vm66, %v45, 0
    %v267 = vsel %vm66, %v46, 0
    %v270 = vsel %vm66, %v47, 0
    %v273 = vsel %vm66, %v48, 0
    %v276 = vsel %vm79, %v52, 0
    %v279 = vsel %vm79, %v53, 0
    %v282 = vsel %vm79, %v54, 0
    %284 = vmatprep.subr.mxu0 %v50
    %285 = vmatpush1.msra.mxu0 %v49
    %286 = vmatprep.subr.mxu0 %v279
    %287 = vmatpush1.msra.mxu0 %v276
    %288 = vmatprep.subr.mxu0 0.0
    %289 = vmatpush1.msra.mxu0 0.0
    %290 = vmatprep.subr.mxu0 0.0
    %291 = vmatpush1.msra.mxu0 0.0
    %292 = vmatprep.subr.mxu0 0.0
    %293 = vmatpush1.msra.mxu0 0.0
    %294 = vmatprep.subr.mxu0 0.0
    %295 = vmatpush1.msra.mxu0 0.0
    %296 = vmatprep.subr.mxu0 0.0
    %297 = vmatpush1.msra.mxu0 0.0
    %298 = vmatprep.subr.mxu0 0.0
    %299 = vmatpush1.msra.mxu0 0.0
    %300 = vmatprep.subr.mxu0 0.0
    %301 = vmatpush1.msra.mxu0 0.0
    %302 = vmatprep.subr.mxu0 0.0
    %303 = vmatpush1.msra.mxu0 0.0
    %304 = vmatprep.subr.mxu0 0.0
    %305 = vmatpush1.msra.mxu0 0.0
    %306 = vmatprep.subr.mxu0 0.0
    %307 = vmatpush1.msra.mxu0 0.0
    %308 = vmatprep.subr.mxu0 0.0
    %309 = vmatpush1.msra.mxu0 0.0
    %310 = vmatprep.subr.mxu0 0.0
    %311 = vmatpush1.msra.mxu0 0.0
    %312 = vmatprep.subr.mxu0 0.0
    %313 = vmatpush1.msra.mxu0 0.0
    %314 = vmatprep.subr.mxu0 0.0
    %315 = vmatpush1.msra.mxu0 0.0
    %316 = vmatprep.subr.mxu0 0.0
    %317 = vmatpush1.msra.mxu0 0.0
    %318 = vmatprep.subr.mxu0 0.0
    %319 = vmatpush1.msra.mxu0 0.0
    %320 = vmatprep.subr.mxu0 0.0
    %321 = vmatpush1.msra.mxu0 0.0
    %322 = vmatprep.subr.mxu0 0.0
    %323 = vmatpush1.msra.mxu0 0.0
    %324 = vmatprep.subr.mxu0 0.0
    %325 = vmatpush1.msra.mxu0 0.0
    %326 = vmatprep.subr.mxu0 0.0
    %327 = vmatpush1.msra.mxu0 0.0
    %328 = vmatprep.subr.mxu0 0.0
    %329 = vmatpush1.msra.mxu0 0.0
    %330 = vmatprep.subr.mxu0 0.0
    %331 = vmatpush1.msra.mxu0 0.0
    %332 = vmatprep.subr.mxu0 0.0
    %333 = vmatpush1.msra.mxu0 0.0
    %334 = vmatprep.subr.mxu0 0.0
    %335 = vmatpush1.msra.mxu0 0.0
    %336 = vmatprep.subr.mxu0 0.0
    %337 = vmatpush1.msra.mxu0 0.0
    %338 = vmatprep.subr.mxu0 0.0
    %339 = vmatpush1.msra.mxu0 0.0
    %340 = vmatprep.subr.mxu0 0.0
    %341 = vmatpush1.msra.mxu0 0.0
    %342 = vmatprep.subr.mxu0 0.0
    %343 = vmatpush1.msra.mxu0 0.0
    %344 = vmatprep.subr.mxu0 0.0
    %345 = vmatpush1.msra.mxu0 0.0
    %346 = vmatprep.subr.mxu0 0.0
    %347 = vmatpush1.msra.mxu0 0.0
    %348 = vmatprep.mubr.f32.mxu0 0.0
    %349 = vmatmul.mubr.f32.gmra.mrb[0].mxu0 %v264
    %v350 = vpop.f32.mrb[0].mxu0
    %v351 = vadd.f32 %v156, %v350
    %v352 = vpop.f32.mrb[0].mxu0
    %v353 = vadd.f32 %v158, %v352
    %354 = vmatprep.mubr.f32.mxu0 0.0
    %355 = vmatmul.mubr.f32.gmra.mrb[0].mxu0 %v267
    %v356 = vpop.f32.mrb[0].mxu0
    %v357 = vadd.f32 %v162, %v356
    %v358 = vpop.f32.mrb[0].mxu0
    %v359 = vadd.f32 %v164, %v358
    %360 = vmatprep.mubr.f32.mxu0 0.0
    %361 = vmatmul.mubr.f32.gmra.mrb[0].mxu0 %v270
    %v362 = vpop.f32.mrb[0].mxu0
    %v363 = vadd.f32 %v168, %v362
    %v364 = vpop.f32.mrb[0].mxu0
    %v365 = vadd.f32 %v170, %v364
    %366 = vmatprep.mubr.f32.mxu0 0.0
    %367 = vmatmul.mubr.f32.gmra.mrb[0].mxu0 %v273
    %v368 = vpop.f32.mrb[0].mxu0
    %v369 = vadd.f32 %v174, %v368
    %v370 = vpop.f32.mrb[0].mxu0
    %v371 = vadd.f32 %v176, %v370
    %372 = vdwg.mxu0
    %373 = vmatprep.subr.mxu0 0.0
    %374 = vmatpush1.msra.mxu0 %v51
    %375 = vmatprep.subr.mxu0 0.0
    %376 = vmatpush1.msra.mxu0 %v282
    %377 = vmatprep.subr.mxu0 0.0
    %378 = vmatpush1.msra.mxu0 0.0
    %379 = vmatprep.subr.mxu0 0.0
    %380 = vmatpush1.msra.mxu0 0.0
    %381 = vmatprep.subr.mxu0 0.0
    %382 = vmatpush1.msra.mxu0 0.0
    %383 = vmatprep.subr.mxu0 0.0
    %384 = vmatpush1.msra.mxu0 0.0
    %385 = vmatprep.subr.mxu0 0.0
    %386 = vmatpush1.msra.mxu0 0.0
    %387 = vmatprep.subr.mxu0 0.0
    %388 = vmatpush1.msra.mxu0 0.0
    %389 = vmatprep.subr.mxu0 0.0
    %390 = vmatpush1.msra.mxu0 0.0
    %391 = vmatprep.subr.mxu0 0.0
    %392 = vmatpush1.msra.mxu0 0.0
    %393 = vmatprep.subr.mxu0 0.0
    %394 = vmatpush1.msra.mxu0 0.0
    %395 = vmatprep.subr.mxu0 0.0
    %396 = vmatpush1.msra.mxu0 0.0
    %397 = vmatprep.subr.mxu0 0.0
    %398 = vmatpush1.msra.mxu0 0.0
    %399 = vmatprep.subr.mxu0 0.0
    %400 = vmatpush1.msra.mxu0 0.0
    %401 = vmatprep.subr.mxu0 0.0
    %402 = vmatpush1.msra.mxu0 0.0
    %403 = vmatprep.subr.mxu0 0.0
    %404 = vmatpush1.msra.mxu0 0.0
    %405 = vmatprep.subr.mxu0 0.0
    %406 = vmatpush1.msra.mxu0 0.0
    %407 = vmatprep.subr.mxu0 0.0
    %408 = vmatpush1.msra.mxu0 0.0
    %409 = vmatprep.subr.mxu0 0.0
    %410 = vmatpush1.msra.mxu0 0.0
    %411 = vmatprep.subr.mxu0 0.0
    %412 = vmatpush1.msra.mxu0 0.0
    %413 = vmatprep.subr.mxu0 0.0
    %414 = vmatpush1.msra.mxu0 0.0
    %415 = vmatprep.subr.mxu0 0.0
    %416 = vmatpush1.msra.mxu0 0.0
    %417 = vmatprep.subr.mxu0 0.0
    %418 = vmatpush1.msra.mxu0 0.0
    %419 = vmatprep.subr.mxu0 0.0
    %420 = vmatpush1.msra.mxu0 0.0
    %421 = vmatprep.subr.mxu0 0.0
    %422 = vmatpush1.msra.mxu0 0.0
    %423 = vmatprep.subr.mxu0 0.0
    %424 = vmatpush1.msra.mxu0 0.0
    %425 = vmatprep.subr.mxu0 0.0
    %426 = vmatpush1.msra.mxu0 0.0
    %427 = vmatprep.subr.mxu0 0.0
    %428 = vmatpush1.msra.mxu0 0.0
    %429 = vmatprep.subr.mxu0 0.0
    %430 = vmatpush1.msra.mxu0 0.0
    %431 = vmatprep.subr.mxu0 0.0
    %432 = vmatpush1.msra.mxu0 0.0
    %433 = vmatprep.subr.mxu0 0.0
    %434 = vmatpush1.msra.mxu0 0.0
    %435 = vmatprep.subr.mxu0 0.0
    %436 = vmatpush1.msra.mxu0 0.0
    %437 = vmatprep.mubr.f32.mxu0 0.0
    %438 = vmatmul.mubr.f32.gmra.mrb[0].mxu0 %v264
    %v439 = vpop.f32.mrb[0].mxu0
    %v440 = vadd.f32 %v245, %v439
    %v441 = vpop.f32.mrb[0].mxu0
    %442 = vmatprep.mubr.f32.mxu0 0.0
    %443 = vmatmul.mubr.f32.gmra.mrb[0].mxu0 %v267
    %v444 = vpop.f32.mrb[0].mxu0
    %v445 = vadd.f32 %v250, %v444
    %v446 = vpop.f32.mrb[0].mxu0
    %447 = vmatprep.mubr.f32.mxu0 0.0
    %448 = vmatmul.mubr.f32.gmra.mrb[0].mxu0 %v270
    %v449 = vpop.f32.mrb[0].mxu0
    %v450 = vadd.f32 %v255, %v449
    %v451 = vpop.f32.mrb[0].mxu0
    %452 = vmatprep.mubr.f32.mxu0 0.0
    %453 = vmatmul.mubr.f32.gmra.mrb[0].mxu0 %v273
    %v454 = vpop.f32.mrb[0].mxu0
    %v455 = vadd.f32 %v260, %v454
    %v456 = vpop.f32.mrb[0].mxu0
    %457 = vdwg.mxu0
    %v458 = vld [vmem:[%s0 + $0x4] sm:$0xff]
    %v459 = vld [vmem:[%s0 + $0xc] sm:$0xff]
    %v460 = vld [vmem:[%s0 + $0x14] sm:$0xff]
    %v461 = vld [vmem:[%s0 + $0x1c] sm:$0xff]
    %s462 = scalar_lea.vmem [#allocation3], 96
    %v463 = vld [vmem:[%s462] sm:$0xff]
    %v464 = vld [vmem:[%s462 + $0x8] sm:$0xff]
    %v465 = vld [vmem:[%s462 + $0x10] sm:$0xff]
    %v466 = vld [vmem:[%s462 + $0x18] sm:$0xf]
    %v467 = vld [vmem:[%s462 + $0x20] sm:$0xf]
    %v468 = vld [vmem:[%s462 + $0x28] sm:$0xf]
    %v470 = vsel %vm66, %v458, 0
    %v473 = vsel %vm66, %v459, 0
    %v476 = vsel %vm66, %v460, 0
    %v479 = vsel %vm66, %v461, 0
    %v482 = vsel %vm79, %v466, 0
    %v485 = vsel %vm79, %v467, 0
    %v488 = vsel %vm79, %v468, 0
    %490 = vmatprep.subr.mxu0 %v464
    %491 = vmatpush1.msra.mxu0 %v463
    %492 = vmatprep.subr.mxu0 %v485
    %493 = vmatpush1.msra.mxu0 %v482
    %494 = vmatprep.subr.mxu0 0.0
    %495 = vmatpush1.msra.mxu0 0.0
    %496 = vmatprep.subr.mxu0 0.0
    %497 = vmatpush1.msra.mxu0 0.0
    %498 = vmatprep.subr.mxu0 0.0
    %499 = vmatpush1.msra.mxu0 0.0
    %500 = vmatprep.subr.mxu0 0.0
    %501 = vmatpush1.msra.mxu0 0.0
    %502 = vmatprep.subr.mxu0 0.0
    %503 = vmatpush1.msra.mxu0 0.0
    %504 = vmatprep.subr.mxu0 0.0
    %505 = vmatpush1.msra.mxu0 0.0
    %506 = vmatprep.subr.mxu0 0.0
    %507 = vmatpush1.msra.mxu0 0.0
    %508 = vmatprep.subr.mxu0 0.0
    %509 = vmatpush1.msra.mxu0 0.0
    %510 = vmatprep.subr.mxu0 0.0
    %511 = vmatpush1.msra.mxu0 0.0
    %512 = vmatprep.subr.mxu0 0.0
    %513 = vmatpush1.msra.mxu0 0.0
    %514 = vmatprep.subr.mxu0 0.0
    %515 = vmatpush1.msra.mxu0 0.0
    %516 = vmatprep.subr.mxu0 0.0
    %517 = vmatpush1.msra.mxu0 0.0
    %518 = vmatprep.subr.mxu0 0.0
    %519 = vmatpush1.msra.mxu0 0.0
    %520 = vmatprep.subr.mxu0 0.0
    %521 = vmatpush1.msra.mxu0 0.0
    %522 = vmatprep.subr.mxu0 0.0
    %523 = vmatpush1.msra.mxu0 0.0
    %524 = vmatprep.subr.mxu0 0.0
    %525 = vmatpush1.msra.mxu0 0.0
    %526 = vmatprep.subr.mxu0 0.0
    %527 = vmatpush1.msra.mxu0 0.0
    %528 = vmatprep.subr.mxu0 0.0
    %529 = vmatpush1.msra.mxu0 0.0
    %530 = vmatprep.subr.mxu0 0.0
    %531 = vmatpush1.msra.mxu0 0.0
    %532 = vmatprep.subr.mxu0 0.0
    %533 = vmatpush1.msra.mxu0 0.0
    %534 = vmatprep.subr.mxu0 0.0
    %535 = vmatpush1.msra.mxu0 0.0
    %536 = vmatprep.subr.mxu0 0.0
    %537 = vmatpush1.msra.mxu0 0.0
    %538 = vmatprep.subr.mxu0 0.0
    %539 = vmatpush1.msra.mxu0 0.0
    %540 = vmatprep.subr.mxu0 0.0
    %541 = vmatpush1.msra.mxu0 0.0
    %542 = vmatprep.subr.mxu0 0.0
    %543 = vmatpush1.msra.mxu0 0.0
    %544 = vmatprep.subr.mxu0 0.0
    %545 = vmatpush1.msra.mxu0 0.0
    %546 = vmatprep.subr.mxu0 0.0
    %547 = vmatpush1.msra.mxu0 0.0
    %548 = vmatprep.subr.mxu0 0.0
    %549 = vmatpush1.msra.mxu0 0.0
    %550 = vmatprep.subr.mxu0 0.0
    %551 = vmatpush1.msra.mxu0 0.0
    %552 = vmatprep.subr.mxu0 0.0
    %553 = vmatpush1.msra.mxu0 0.0
    %554 = vmatprep.mubr.f32.mxu0 0.0
    %555 = vmatmul.mubr.f32.gmra.mrb[0].mxu0 %v470
    %v556 = vpop.f32.mrb[0].mxu0
    %v557 = vadd.f32 0.0, %v556
    %v558 = vpop.f32.mrb[0].mxu0
    %v559 = vadd.f32 0.0, %v558
    %560 = vmatprep.mubr.f32.mxu0 0.0
    %561 = vmatmul.mubr.f32.gmra.mrb[0].mxu0 %v473
    %v562 = vpop.f32.mrb[0].mxu0
    %v563 = vadd.f32 0.0, %v562
    %v564 = vpop.f32.mrb[0].mxu0
    %v565 = vadd.f32 0.0, %v564
    %566 = vmatprep.mubr.f32.mxu0 0.0
    %567 = vmatmul.mubr.f32.gmra.mrb[0].mxu0 %v476
    %v568 = vpop.f32.mrb[0].mxu0
    %v569 = vadd.f32 0.0, %v568
    %v570 = vpop.f32.mrb[0].mxu0
    %v571 = vadd.f32 0.0, %v570
    %572 = vmatprep.mubr.f32.mxu0 0.0
    %573 = vmatmul.mubr.f32.gmra.mrb[0].mxu0 %v479
    %v574 = vpop.f32.mrb[0].mxu0
    %v575 = vadd.f32 0.0, %v574
    %v576 = vpop.f32.mrb[0].mxu0
    %v577 = vadd.f32 0.0, %v576
    %578 = vdwg.mxu0
    %579 = vmatprep.subr.mxu0 0.0
    %580 = vmatpush1.msra.mxu0 %v465
    %581 = vmatprep.subr.mxu0 0.0
    %582 = vmatpush1.msra.mxu0 %v488
    %583 = vmatprep.subr.mxu0 0.0
    %584 = vmatpush1.msra.mxu0 0.0
    %585 = vmatprep.subr.mxu0 0.0
    %586 = vmatpush1.msra.mxu0 0.0
    %587 = vmatprep.subr.mxu0 0.0
    %588 = vmatpush1.msra.mxu0 0.0
    %589 = vmatprep.subr.mxu0 0.0
    %590 = vmatpush1.msra.mxu0 0.0
    %591 = vmatprep.subr.mxu0 0.0
    %592 = vmatpush1.msra.mxu0 0.0
    %593 = vmatprep.subr.mxu0 0.0
    %594 = vmatpush1.msra.mxu0 0.0
    %595 = vmatprep.subr.mxu0 0.0
    %596 = vmatpush1.msra.mxu0 0.0
    %597 = vmatprep.subr.mxu0 0.0
    %598 = vmatpush1.msra.mxu0 0.0
    %599 = vmatprep.subr.mxu0 0.0
    %600 = vmatpush1.msra.mxu0 0.0
    %601 = vmatprep.subr.mxu0 0.0
    %602 = vmatpush1.msra.mxu0 0.0
    %603 = vmatprep.subr.mxu0 0.0
    %604 = vmatpush1.msra.mxu0 0.0
    %605 = vmatprep.subr.mxu0 0.0
    %606 = vmatpush1.msra.mxu0 0.0
    %607 = vmatprep.subr.mxu0 0.0
    %608 = vmatpush1.msra.mxu0 0.0
    %609 = vmatprep.subr.mxu0 0.0
    %610 = vmatpush1.msra.mxu0 0.0
    %611 = vmatprep.subr.mxu0 0.0
    %612 = vmatpush1.msra.mxu0 0.0
    %613 = vmatprep.subr.mxu0 0.0
    %614 = vmatpush1.msra.mxu0 0.0
    %615 = vmatprep.subr.mxu0 0.0
    %616 = vmatpush1.msra.mxu0 0.0
    %617 = vmatprep.subr.mxu0 0.0
    %618 = vmatpush1.msra.mxu0 0.0
    %619 = vmatprep.subr.mxu0 0.0
    %620 = vmatpush1.msra.mxu0 0.0
    %621 = vmatprep.subr.mxu0 0.0
    %622 = vmatpush1.msra.mxu0 0.0
    %623 = vmatprep.subr.mxu0 0.0
    %624 = vmatpush1.msra.mxu0 0.0
    %625 = vmatprep.subr.mxu0 0.0
    %626 = vmatpush1.msra.mxu0 0.0
    %627 = vmatprep.subr.mxu0 0.0
    %628 = vmatpush1.msra.mxu0 0.0
    %629 = vmatprep.subr.mxu0 0.0
    %630 = vmatpush1.msra.mxu0 0.0
    %631 = vmatprep.subr.mxu0 0.0
    %632 = vmatpush1.msra.mxu0 0.0
    %633 = vmatprep.subr.mxu0 0.0
    %634 = vmatpush1.msra.mxu0 0.0
    %635 = vmatprep.subr.mxu0 0.0
    %636 = vmatpush1.msra.mxu0 0.0
    %637 = vmatprep.subr.mxu0 0.0
    %638 = vmatpush1.msra.mxu0 0.0
    %639 = vmatprep.subr.mxu0 0.0
    %640 = vmatpush1.msra.mxu0 0.0
    %641 = vmatprep.subr.mxu0 0.0
    %642 = vmatpush1.msra.mxu0 0.0
    %643 = vmatprep.mubr.f32.mxu0 0.0
    %644 = vmatmul.mubr.f32.gmra.mrb[0].mxu0 %v470
    %v645 = vpop.f32.mrb[0].mxu0
    %v646 = vadd.f32 0.0, %v645
    %v647 = vpop.f32.mrb[0].mxu0
    %648 = vmatprep.mubr.f32.mxu0 0.0
    %649 = vmatmul.mubr.f32.gmra.mrb[0].mxu0 %v473
    %v650 = vpop.f32.mrb[0].mxu0
    %v651 = vadd.f32 0.0, %v650
    %v652 = vpop.f32.mrb[0].mxu0
    %653 = vmatprep.mubr.f32.mxu0 0.0
    %654 = vmatmul.mubr.f32.gmra.mrb[0].mxu0 %v476
    %v655 = vpop.f32.mrb[0].mxu0
    %v656 = vadd.f32 0.0, %v655
    %v657 = vpop.f32.mrb[0].mxu0
    %658 = vmatprep.mubr.f32.mxu0 0.0
    %659 = vmatmul.mubr.f32.gmra.mrb[0].mxu0 %v479
    %v660 = vpop.f32.mrb[0].mxu0
    %v661 = vadd.f32 0.0, %v660
    %v662 = vpop.f32.mrb[0].mxu0
    %663 = vdwg.mxu0
    %v664 = vadd.f32 %v351, %v557
    %v665 = vadd.f32 %v353, %v559
    %v666 = vadd.f32 %v440, %v646
    %v667 = vadd.f32 %v357, %v563
    %v668 = vadd.f32 %v359, %v565
    %v669 = vadd.f32 %v445, %v651
    %v670 = vadd.f32 %v363, %v569
    %v671 = vadd.f32 %v365, %v571
    %v672 = vadd.f32 %v450, %v656
    %v673 = vadd.f32 %v369, %v575
    %v674 = vadd.f32 %v371, %v577
    %v675 = vadd.f32 %v455, %v661
    %v676 = vmax.f32 %v664, 0.0
    %v677 = vmax.f32 %v665, 0.0
    %v678 = vmax.f32 %v666, 0.0
    %v679 = vmax.f32 %v667, 0.0
    %v680 = vmax.f32 %v668, 0.0
    %v681 = vmax.f32 %v669, 0.0
    %v682 = vmax.f32 %v670, 0.0
    %v683 = vmax.f32 %v671, 0.0
    %v684 = vmax.f32 %v672, 0.0
    %v685 = vmax.f32 %v673, 0.0
    %v686 = vmax.f32 %v674, 0.0
    %v687 = vmax.f32 %v675, 0.0
    %v688 = vadd.f32 %v676, %v677
    %v689 = vadd.f32 %v679, %v680
    %v690 = vadd.f32 %v682, %v683
    %v691 = vadd.f32 %v685, %v686
    %v692 = vadd.f32 %v688, %v678
    %v693 = vadd.f32 %v689, %v681
    %v694 = vadd.f32 %v690, %v684
    %v695 = vadd.f32 %v691, %v687
    %v697 = vrot.slane %v692, 2
    %v699 = vadd.f32 %v692, %v697
    %v700 = vrot.slane %v692, 4
    %v702 = vadd.f32 %v699, %v700
    %v703 = vrot.slane %v692, 6
    %v705 = vadd.f32 %v702, %v703
    %706 = vst [vmem:[#allocation2 + $0x2] sm:$0x3] %v705
    %v708 = vrot.slane %v693, 2
    %v710 = vadd.f32 %v693, %v708
    %v711 = vrot.slane %v693, 4
    %v713 = vadd.f32 %v710, %v711
    %v714 = vrot.slane %v693, 6
    %v716 = vadd.f32 %v713, %v714
    %717 = vst [vmem:[#allocation2 + $0x4] sm:$0x3] %v716
    %v719 = vrot.slane %v694, 2
    %v721 = vadd.f32 %v694, %v719
    %v722 = vrot.slane %v694, 4
    %v724 = vadd.f32 %v721, %v722
    %v725 = vrot.slane %v694, 6
    %v727 = vadd.f32 %v724, %v725
    %728 = vst [vmem:[#allocation2 + $0x6] sm:$0x3] %v727
    %v730 = vrot.slane %v695, 2
    %v732 = vadd.f32 %v695, %v730
    %v733 = vrot.slane %v695, 4
    %v735 = vadd.f32 %v732, %v733
    %v736 = vrot.slane %v695, 6
    %v738 = vadd.f32 %v735, %v736
    %739 = vst [vmem:[#allocation2 + $0x8] sm:$0x3] %v738
    %v740 = vld [vmem:[#allocation2 + $0x2] sm:$0xff]
    %v741 = vld [vmem:[#allocation2] sm:$0xff]
    %v742 = vld [vmem:[#allocation2 + $0x4] sm:$0xff]
    %v743 = vld [vmem:[#allocation6] sm:$0xff]
    %v744 = vld [vmem:[#allocation6 + $0x8] sm:$0xff]
    %v745 = vld [vmem:[#allocation6 + $0x10] sm:$0xff]
    %v746 = vld [vmem:[#allocation6 + $0x18] sm:$0xff]
    %v747 = vld [vmem:[#allocation6 + $0x20] sm:$0xff]
    %v748 = vld [vmem:[#allocation6 + $0x28] sm:$0xff]
    %v749 = vld [vmem:[#allocation6 + $0x30] sm:$0xff]
    %v750 = vld [vmem:[#allocation6 + $0x38] sm:$0xff]
    %v751 = vld [vmem:[#allocation6 + $0x40] sm:$0xff]
    %v752 = vld [vmem:[#allocation6 + $0x48] sm:$0xff]
    %v753 = vld [vmem:[#allocation6 + $0x50] sm:$0xff]
    %v754 = vld [vmem:[#allocation6 + $0x58] sm:$0xff]
    %v755 = vld [vmem:[#allocation6 + $0x60] sm:$0xff]
    %v756 = vld [vmem:[#allocation6 + $0x68] sm:$0xff]
    %v757 = vld [vmem:[#allocation6 + $0x70] sm:$0xff]
    %v758 = vld [vmem:[#allocation6 + $0x78] sm:$0xff]
    %v759 = vld [vmem:[#allocation6 + $0x80] sm:$0xff]
    %v760 = vld [vmem:[#allocation6 + $0x88] sm:$0xff]
    %v761 = vld [vmem:[#allocation6 + $0x90] sm:$0xff]
    %v762 = vld [vmem:[#allocation6 + $0x98] sm:$0xff]
    %v763 = vld [vmem:[#allocation6 + $0xa0] sm:$0xff]
    %v764 = vld [vmem:[#allocation6 + $0xa8] sm:$0xff]
    %v765 = vld [vmem:[#allocation6 + $0xb0] sm:$0xff]
    %v766 = vld [vmem:[#allocation6 + $0xb8] sm:$0xff]
    %v767 = vld [vmem:[#allocation6 + $0xc0] sm:$0xff]
    %v768 = vld [vmem:[#allocation6 + $0xc8] sm:$0xff]
    %v769 = vld [vmem:[#allocation6 + $0xd0] sm:$0xff]
    %v770 = vld [vmem:[#allocation6 + $0xd8] sm:$0xff]
    %v771 = vld [vmem:[#allocation6 + $0xe0] sm:$0xff]
    %v772 = vld [vmem:[#allocation6 + $0xe8] sm:$0xff]
    %v773 = vld [vmem:[#allocation6 + $0xf0] sm:$0xff]
    %v774 = vld [vmem:[#allocation6 + $0xf8] sm:$0xff]
    %v775 = vld [vmem:[#allocation6 + $0x100] sm:$0xff]
    %v776 = vld [vmem:[#allocation6 + $0x108] sm:$0xff]
    %v777 = vld [vmem:[#allocation6 + $0x110] sm:$0xff]
    %v778 = vld [vmem:[#allocation6 + $0x118] sm:$0xff]
    %v779 = vld [vmem:[#allocation6 + $0x120] sm:$0xff]
    %v780 = vld [vmem:[#allocation6 + $0x128] sm:$0xff]
    %v781 = vld [vmem:[#allocation6 + $0x130] sm:$0xff]
    %v782 = vld [vmem:[#allocation6 + $0x138] sm:$0xff]
    %v783 = vld [vmem:[#allocation6 + $0x140] sm:$0xff]
    %v784 = vld [vmem:[#allocation6 + $0x148] sm:$0xff]
    %v785 = vld [vmem:[#allocation6 + $0x150] sm:$0xff]
    %v786 = vld [vmem:[#allocation6 + $0x158] sm:$0xff]
    %v787 = vld [vmem:[#allocation6 + $0x160] sm:$0xff]
    %v788 = vld [vmem:[#allocation6 + $0x168] sm:$0xff]
    %v789 = vld [vmem:[#allocation6 + $0x170] sm:$0xff]
    %v790 = vld [vmem:[#allocation6 + $0x178] sm:$0xff]
    %791 = vmatprep.subr.mxu0 0.0
    %792 = vmatpush1.msra.mxu0 %v743
    %793 = vmatprep.subr.mxu0 0.0
    %794 = vmatpush1.msra.mxu0 %v744
    %795 = vmatprep.subr.mxu0 0.0
    %796 = vmatpush1.msra.mxu0 %v745
    %797 = vmatprep.subr.mxu0 0.0
    %798 = vmatpush1.msra.mxu0 %v746
    %799 = vmatprep.subr.mxu0 0.0
    %800 = vmatpush1.msra.mxu0 %v747
    %801 = vmatprep.subr.mxu0 0.0
    %802 = vmatpush1.msra.mxu0 %v748
    %803 = vmatprep.subr.mxu0 0.0
    %804 = vmatpush1.msra.mxu0 %v749
    %805 = vmatprep.subr.mxu0 0.0
    %806 = vmatpush1.msra.mxu0 %v750
    %807 = vmatprep.subr.mxu0 0.0
    %808 = vmatpush1.msra.mxu0 %v751
    %809 = vmatprep.subr.mxu0 0.0
    %810 = vmatpush1.msra.mxu0 %v752
    %811 = vmatprep.subr.mxu0 0.0
    %812 = vmatpush1.msra.mxu0 %v753
    %813 = vmatprep.subr.mxu0 0.0
    %814 = vmatpush1.msra.mxu0 %v754
    %815 = vmatprep.subr.mxu0 0.0
    %816 = vmatpush1.msra.mxu0 %v755
    %817 = vmatprep.subr.mxu0 0.0
    %818 = vmatpush1.msra.mxu0 %v756
    %819 = vmatprep.subr.mxu0 0.0
    %820 = vmatpush1.msra.mxu0 %v757
    %821 = vmatprep.subr.mxu0 0.0
    %822 = vmatpush1.msra.mxu0 %v758
    %823 = vmatprep.subr.mxu0 0.0
    %824 = vmatpush1.msra.mxu0 %v759
    %825 = vmatprep.subr.mxu0 0.0
    %826 = vmatpush1.msra.mxu0 %v760
    %827 = vmatprep.subr.mxu0 0.0
    %828 = vmatpush1.msra.mxu0 %v761
    %829 = vmatprep.subr.mxu0 0.0
    %830 = vmatpush1.msra.mxu0 %v762
    %831 = vmatprep.subr.mxu0 0.0
    %832 = vmatpush1.msra.mxu0 %v763
    %833 = vmatprep.subr.mxu0 0.0
    %834 = vmatpush1.msra.mxu0 %v764
    %835 = vmatprep.subr.mxu0 0.0
    %836 = vmatpush1.msra.mxu0 %v765
    %837 = vmatprep.subr.mxu0 0.0
    %838 = vmatpush1.msra.mxu0 %v766
    %839 = vmatprep.subr.mxu0 0.0
    %840 = vmatpush1.msra.mxu0 %v767
    %841 = vmatprep.subr.mxu0 0.0
    %842 = vmatpush1.msra.mxu0 %v768
    %843 = vmatprep.subr.mxu0 0.0
    %844 = vmatpush1.msra.mxu0 %v769
    %845 = vmatprep.subr.mxu0 0.0
    %846 = vmatpush1.msra.mxu0 %v770
    %847 = vmatprep.subr.mxu0 0.0
    %848 = vmatpush1.msra.mxu0 %v771
    %849 = vmatprep.subr.mxu0 0.0
    %850 = vmatpush1.msra.mxu0 %v772
    %851 = vmatprep.subr.mxu0 0.0
    %852 = vmatpush1.msra.mxu0 %v773
    %853 = vmatprep.subr.mxu0 0.0
    %854 = vmatpush1.msra.mxu0 %v774
    %855 = vmatprep.mubr.f32.mxu0 %v740
    %856 = vmatmul.mubr.f32.gmra.mrb[0].mxu0 %v741
    %v857 = vpop.f32.mrb[0].mxu0
    %v858 = vadd.f32 0.0, %v857
    %v859 = vpop.f32.mrb[0].mxu0
    %860 = vdwg.mxu0
    %861 = vmatprep.subr.mxu0 0.0
    %862 = vmatpush1.msra.mxu0 %v775
    %863 = vmatprep.subr.mxu0 0.0
    %864 = vmatpush1.msra.mxu0 %v776
    %865 = vmatprep.subr.mxu0 0.0
    %866 = vmatpush1.msra.mxu0 %v777
    %867 = vmatprep.subr.mxu0 0.0
    %868 = vmatpush1.msra.mxu0 %v778
    %869 = vmatprep.subr.mxu0 0.0
    %870 = vmatpush1.msra.mxu0 %v779
    %871 = vmatprep.subr.mxu0 0.0
    %872 = vmatpush1.msra.mxu0 %v780
    %873 = vmatprep.subr.mxu0 0.0
    %874 = vmatpush1.msra.mxu0 %v781
    %875 = vmatprep.subr.mxu0 0.0
    %876 = vmatpush1.msra.mxu0 %v782
    %877 = vmatprep.subr.mxu0 0.0
    %878 = vmatpush1.msra.mxu0 %v783
    %879 = vmatprep.subr.mxu0 0.0
    %880 = vmatpush1.msra.mxu0 %v784
    %881 = vmatprep.subr.mxu0 0.0
    %882 = vmatpush1.msra.mxu0 %v785
    %883 = vmatprep.subr.mxu0 0.0
    %884 = vmatpush1.msra.mxu0 %v786
    %885 = vmatprep.subr.mxu0 0.0
    %886 = vmatpush1.msra.mxu0 %v787
    %887 = vmatprep.subr.mxu0 0.0
    %888 = vmatpush1.msra.mxu0 %v788
    %889 = vmatprep.subr.mxu0 0.0
    %890 = vmatpush1.msra.mxu0 %v789
    %891 = vmatprep.subr.mxu0 0.0
    %892 = vmatpush1.msra.mxu0 %v790
    %893 = vmatprep.subr.mxu0 0.0
    %894 = vmatpush1.msra.mxu0 0.0
    %895 = vmatprep.subr.mxu0 0.0
    %896 = vmatpush1.msra.mxu0 0.0
    %897 = vmatprep.subr.mxu0 0.0
    %898 = vmatpush1.msra.mxu0 0.0
    %899 = vmatprep.subr.mxu0 0.0
    %900 = vmatpush1.msra.mxu0 0.0
    %901 = vmatprep.subr.mxu0 0.0
    %902 = vmatpush1.msra.mxu0 0.0
    %903 = vmatprep.subr.mxu0 0.0
    %904 = vmatpush1.msra.mxu0 0.0
    %905 = vmatprep.subr.mxu0 0.0
    %906 = vmatpush1.msra.mxu0 0.0
    %907 = vmatprep.subr.mxu0 0.0
    %908 = vmatpush1.msra.mxu0 0.0
    %909 = vmatprep.subr.mxu0 0.0
    %910 = vmatpush1.msra.mxu0 0.0
    %911 = vmatprep.subr.mxu0 0.0
    %912 = vmatpush1.msra.mxu0 0.0
    %913 = vmatprep.subr.mxu0 0.0
    %914 = vmatpush1.msra.mxu0 0.0
    %915 = vmatprep.subr.mxu0 0.0
    %916 = vmatpush1.msra.mxu0 0.0
    %917 = vmatprep.subr.mxu0 0.0
    %918 = vmatpush1.msra.mxu0 0.0
    %919 = vmatprep.subr.mxu0 0.0
    %920 = vmatpush1.msra.mxu0 0.0
    %921 = vmatprep.subr.mxu0 0.0
    %922 = vmatpush1.msra.mxu0 0.0
    %923 = vmatprep.subr.mxu0 0.0
    %924 = vmatpush1.msra.mxu0 0.0
    %925 = vmatprep.mubr.f32.mxu0 0.0
    %926 = vmatmul.mubr.f32.gmra.mrb[0].mxu0 %v742
    %v927 = vpop.f32.mrb[0].mxu0
    %v928 = vadd.f32 %v858, %v927
    %v929 = vpop.f32.mrb[0].mxu0
    %930 = vdwg.mxu0
    %v931 = vmax.f32 %v928, 0.0
    %v932 = vrot.slane %v931, 4
    %v933 = vadd.f32 %v931, %v932
    %v934 = vrot.slane %v933, 2
    %v935 = vadd.f32 %v933, %v934
    %v936 = vrot.slane %v935, 1
    %v937 = vadd.f32 %v935, %v936
    %938 = vrot.lane.b32.xlu0 %v937, 32
    %v939 = vpop.permute.xlu0 %938
    %v940 = vadd.f32 %v937, %v939
    %941 = vrot.lane.b32.xlu0 %v940, 64
    %v942 = vpop.permute.xlu0 %941
    %v943 = vadd.f32 %v940, %v942
    %v944 = vmul.f32 %v943, 0.03125
    %v945 = vlaneseq
    %v946 = vshrl.u32 %v945, 7
    %v947 = vsub.s32 0, %v946
    %v948 = vrot.slane %v944, %v947
    %v949 = vsub.f32 %v931, %v948
    %v950 = vmul.f32 %v949, %v949
    %v951 = vrot.slane %v950, 4
    %v952 = vadd.f32 %v950, %v951
    %v953 = vrot.slane %v952, 2
    %v954 = vadd.f32 %v952, %v953
    %v955 = vrot.slane %v954, 1
    %v956 = vadd.f32 %v954, %v955
    %957 = vrot.lane.b32.xlu0 %v956, 32
    %v958 = vpop.permute.xlu0 %957
    %v959 = vadd.f32 %v956, %v958
    %960 = vrot.lane.b32.xlu0 %v959, 64
    %v961 = vpop.permute.xlu0 %960
    %v962 = vadd.f32 %v959, %v961
    %v963 = vmul.f32 %v962, 0.03125
    %v964 = vadd.f32 %v963, 1e-05
    %v965 = vrsqrt.pop %v964
    %v966 = vlaneseq
    %v967 = vshrl.u32 %v966, 7
    %v968 = vsub.s32 0, %v967
    %v969 = vrot.slane %v965, %v968
    %v970 = vmul.f32 %v949, %v969
    %971 = vst [vmem:[#allocation2 + $0x2] sm:$0xff] %v970
    %v972 = vld [vmem:[#allocation2] sm:$0xff]
    %v973 = vld [vmem:[#allocation2 + $0x2] sm:$0xff]
    %v974 = vld [vmem:[#allocation2 + $0x4] sm:$0xff]
    %s975 = scalar_lea.vmem [#allocation6], 384
    %v976 = vld [vmem:[%s975] sm:$0xff]
    %v977 = vld [vmem:[%s975 + $0x8] sm:$0xff]
    %v978 = vld [vmem:[%s975 + $0x10] sm:$0xff]
    %v979 = vld [vmem:[%s975 + $0x18] sm:$0xff]
    %v980 = vld [vmem:[%s975 + $0x20] sm:$0xff]
    %v981 = vld [vmem:[%s975 + $0x28] sm:$0xff]
    %v982 = vld [vmem:[%s975 + $0x30] sm:$0xff]
    %v983 = vld [vmem:[%s975 + $0x38] sm:$0xff]
    %v984 = vld [vmem:[%s975 + $0x40] sm:$0xff]
    %v985 = vld [vmem:[%s975 + $0x48] sm:$0xff]
    %v986 = vld [vmem:[%s975 + $0x50] sm:$0xff]
    %v987 = vld [vmem:[%s975 + $0x58] sm:$0xff]
    %v988 = vld [vmem:[%s975 + $0x60] sm:$0xff]
    %v989 = vld [vmem:[%s975 + $0x68] sm:$0xff]
    %v990 = vld [vmem:[%s975 + $0x70] sm:$0xff]
    %v991 = vld [vmem:[%s975 + $0x78] sm:$0xff]
    %v992 = vld [vmem:[%s975 + $0x80] sm:$0xff]
    %v993 = vld [vmem:[%s975 + $0x88] sm:$0xff]
    %v994 = vld [vmem:[%s975 + $0x90] sm:$0xff]
    %v995 = vld [vmem:[%s975 + $0x98] sm:$0xff]
    %v996 = vld [vmem:[%s975 + $0xa0] sm:$0xff]
    %v997 = vld [vmem:[%s975 + $0xa8] sm:$0xff]
    %v998 = vld [vmem:[%s975 + $0xb0] sm:$0xff]
    %v999 = vld [vmem:[%s975 + $0xb8] sm:$0xff]
    %v1000 = vld [vmem:[%s975 + $0xc0] sm:$0xff]
    %v1001 = vld [vmem:[%s975 + $0xc8] sm:$0xff]
    %v1002 = vld [vmem:[%s975 + $0xd0] sm:$0xff]
    %v1003 = vld [vmem:[%s975 + $0xd8] sm:$0xff]
    %v1004 = vld [vmem:[%s975 + $0xe0] sm:$0xff]
    %v1005 = vld [vmem:[%s975 + $0xe8] sm:$0xff]
    %v1006 = vld [vmem:[%s975 + $0xf0] sm:$0xff]
    %v1007 = vld [vmem:[%s975 + $0xf8] sm:$0xff]
    %v1008 = vld [vmem:[%s975 + $0x100] sm:$0xff]
    %v1009 = vld [vmem:[%s975 + $0x108] sm:$0xff]
    %v1010 = vld [vmem:[%s975 + $0x110] sm:$0xff]
    %v1011 = vld [vmem:[%s975 + $0x118] sm:$0xff]
    %v1012 = vld [vmem:[%s975 + $0x120] sm:$0xff]
    %v1013 = vld [vmem:[%s975 + $0x128] sm:$0xff]
    %v1014 = vld [vmem:[%s975 + $0x130] sm:$0xff]
    %v1015 = vld [vmem:[%s975 + $0x138] sm:$0xff]
    %v1016 = vld [vmem:[%s975 + $0x140] sm:$0xff]
    %v1017 = vld [vmem:[%s975 + $0x148] sm:$0xff]
    %v1018 = vld [vmem:[%s975 + $0x150] sm:$0xff]
    %v1019 = vld [vmem:[%s975 + $0x158] sm:$0xff]
    %v1020 = vld [vmem:[%s975 + $0x160] sm:$0xff]
    %v1021 = vld [vmem:[%s975 + $0x168] sm:$0xff]
    %v1022 = vld [vmem:[%s975 + $0x170] sm:$0xff]
    %v1023 = vld [vmem:[%s975 + $0x178] sm:$0xff]
    %1024 = vmatprep.subr.mxu0 0.0
    %1025 = vmatpush1.msra.mxu0 %v976
    %1026 = vmatprep.subr.mxu0 0.0
    %1027 = vmatpush1.msra.mxu0 %v977
    %1028 = vmatprep.subr.mxu0 0.0
    %1029 = vmatpush1.msra.mxu0 %v978
    %1030 = vmatprep.subr.mxu0 0.0
    %1031 = vmatpush1.msra.mxu0 %v979
    %1032 = vmatprep.subr.mxu0 0.0
    %1033 = vmatpush1.msra.mxu0 %v980
    %1034 = vmatprep.subr.mxu0 0.0
    %1035 = vmatpush1.msra.mxu0 %v981
    %1036 = vmatprep.subr.mxu0 0.0
    %1037 = vmatpush1.msra.mxu0 %v982
    %1038 = vmatprep.subr.mxu0 0.0
    %1039 = vmatpush1.msra.mxu0 %v983
    %1040 = vmatprep.subr.mxu0 0.0
    %1041 = vmatpush1.msra.mxu0 %v984
    %1042 = vmatprep.subr.mxu0 0.0
    %1043 = vmatpush1.msra.mxu0 %v985
    %1044 = vmatprep.subr.mxu0 0.0
    %1045 = vmatpush1.msra.mxu0 %v986
    %1046 = vmatprep.subr.mxu0 0.0
    %1047 = vmatpush1.msra.mxu0 %v987
    %1048 = vmatprep.subr.mxu0 0.0
    %1049 = vmatpush1.msra.mxu0 %v988
    %1050 = vmatprep.subr.mxu0 0.0
    %1051 = vmatpush1.msra.mxu0 %v989
    %1052 = vmatprep.subr.mxu0 0.0
    %1053 = vmatpush1.msra.mxu0 %v990
    %1054 = vmatprep.subr.mxu0 0.0
    %1055 = vmatpush1.msra.mxu0 %v991
    %1056 = vmatprep.subr.mxu0 0.0
    %1057 = vmatpush1.msra.mxu0 %v992
    %1058 = vmatprep.subr.mxu0 0.0
    %1059 = vmatpush1.msra.mxu0 %v993
    %1060 = vmatprep.subr.mxu0 0.0
    %1061 = vmatpush1.msra.mxu0 %v994
    %1062 = vmatprep.subr.mxu0 0.0
    %1063 = vmatpush1.msra.mxu0 %v995
    %1064 = vmatprep.subr.mxu0 0.0
    %1065 = vmatpush1.msra.mxu0 %v996
    %1066 = vmatprep.subr.mxu0 0.0
    %1067 = vmatpush1.msra.mxu0 %v997
    %1068 = vmatprep.subr.mxu0 0.0
    %1069 = vmatpush1.msra.mxu0 %v998
    %1070 = vmatprep.subr.mxu0 0.0
    %1071 = vmatpush1.msra.mxu0 %v999
    %1072 = vmatprep.subr.mxu0 0.0
    %1073 = vmatpush1.msra.mxu0 %v1000
    %1074 = vmatprep.subr.mxu0 0.0
    %1075 = vmatpush1.msra.mxu0 %v1001
    %1076 = vmatprep.subr.mxu0 0.0
    %1077 = vmatpush1.msra.mxu0 %v1002
    %1078 = vmatprep.subr.mxu0 0.0
    %1079 = vmatpush1.msra.mxu0 %v1003
    %1080 = vmatprep.subr.mxu0 0.0
    %1081 = vmatpush1.msra.mxu0 %v1004
    %1082 = vmatprep.subr.mxu0 0.0
    %1083 = vmatpush1.msra.mxu0 %v1005
    %1084 = vmatprep.subr.mxu0 0.0
    %1085 = vmatpush1.msra.mxu0 %v1006
    %1086 = vmatprep.subr.mxu0 0.0
    %1087 = vmatpush1.msra.mxu0 %v1007
    %1088 = vmatprep.mubr.f32.mxu0 %v973
    %1089 = vmatmul.mubr.f32.gmra.mrb[0].mxu0 %v972
    %v1090 = vpop.f32.mrb[0].mxu0
    %v1091 = vadd.f32 0.0, %v1090
    %v1092 = vpop.f32.mrb[0].mxu0
    %1093 = vdwg.mxu0
    %1094 = vmatprep.subr.mxu0 0.0
    %1095 = vmatpush1.msra.mxu0 %v1008
    %1096 = vmatprep.subr.mxu0 0.0
    %1097 = vmatpush1.msra.mxu0 %v1009
    %1098 = vmatprep.subr.mxu0 0.0
    %1099 = vmatpush1.msra.mxu0 %v1010
    %1100 = vmatprep.subr.mxu0 0.0
    %1101 = vmatpush1.msra.mxu0 %v1011
    %1102 = vmatprep.subr.mxu0 0.0
    %1103 = vmatpush1.msra.mxu0 %v1012
    %1104 = vmatprep.subr.mxu0 0.0
    %1105 = vmatpush1.msra.mxu0 %v1013
    %1106 = vmatprep.subr.mxu0 0.0
    %1107 = vmatpush1.msra.mxu0 %v1014
    %1108 = vmatprep.subr.mxu0 0.0
    %1109 = vmatpush1.msra.mxu0 %v1015
    %1110 = vmatprep.subr.mxu0 0.0
    %1111 = vmatpush1.msra.mxu0 %v1016
    %1112 = vmatprep.subr.mxu0 0.0
    %1113 = vmatpush1.msra.mxu0 %v1017
    %1114 = vmatprep.subr.mxu0 0.0
    %1115 = vmatpush1.msra.mxu0 %v1018
    %1116 = vmatprep.subr.mxu0 0.0
    %1117 = vmatpush1.msra.mxu0 %v1019
    %1118 = vmatprep.subr.mxu0 0.0
    %1119 = vmatpush1.msra.mxu0 %v1020
    %1120 = vmatprep.subr.mxu0 0.0
    %1121 = vmatpush1.msra.mxu0 %v1021
    %1122 = vmatprep.subr.mxu0 0.0
    %1123 = vmatpush1.msra.mxu0 %v1022
    %1124 = vmatprep.subr.mxu0 0.0
    %1125 = vmatpush1.msra.mxu0 %v1023
    %1126 = vmatprep.subr.mxu0 0.0
    %1127 = vmatpush1.msra.mxu0 0.0
    %1128 = vmatprep.subr.mxu0 0.0
    %1129 = vmatpush1.msra.mxu0 0.0
    %1130 = vmatprep.subr.mxu0 0.0
    %1131 = vmatpush1.msra.mxu0 0.0
    %1132 = vmatprep.subr.mxu0 0.0
    %1133 = vmatpush1.msra.mxu0 0.0
    %1134 = vmatprep.subr.mxu0 0.0
    %1135 = vmatpush1.msra.mxu0 0.0
    %1136 = vmatprep.subr.mxu0 0.0
    %1137 = vmatpush1.msra.mxu0 0.0
    %1138 = vmatprep.subr.mxu0 0.0
    %1139 = vmatpush1.msra.mxu0 0.0
    %1140 = vmatprep.subr.mxu0 0.0
    %1141 = vmatpush1.msra.mxu0 0.0
    %1142 = vmatprep.subr.mxu0 0.0
    %1143 = vmatpush1.msra.mxu0 0.0
    %1144 = vmatprep.subr.mxu0 0.0
    %1145 = vmatpush1.msra.mxu0 0.0
    %1146 = vmatprep.subr.mxu0 0.0
    %1147 = vmatpush1.msra.mxu0 0.0
    %1148 = vmatprep.subr.mxu0 0.0
    %1149 = vmatpush1.msra.mxu0 0.0
    %1150 = vmatprep.subr.mxu0 0.0
    %1151 = vmatpush1.msra.mxu0 0.0
    %1152 = vmatprep.subr.mxu0 0.0
    %1153 = vmatpush1.msra.mxu0 0.0
    %1154 = vmatprep.subr.mxu0 0.0
    %1155 = vmatpush1.msra.mxu0 0.0
    %1156 = vmatprep.subr.mxu0 0.0
    %1157 = vmatpush1.msra.mxu0 0.0
    %1158 = vmatprep.mubr.f32.mxu0 0.0
    %1159 = vmatmul.mubr.f32.gmra.mrb[0].mxu0 %v974
    %v1160 = vpop.f32.mrb[0].mxu0
    %v1161 = vadd.f32 %v1091, %v1160
    %v1162 = vpop.f32.mrb[0].mxu0
    %1163 = vdwg.mxu0
    %v1164 = vmax.f32 %v1161, 0.0
    %v1165 = vadd.f32 %v1164, %v740
    %v1166 = vrot.slane %v1165, 4
    %v1167 = vadd.f32 %v1165, %v1166
    %v1168 = vrot.slane %v1167, 2
    %v1169 = vadd.f32 %v1167, %v1168
    %v1170 = vrot.slane %v1169, 1
    %v1171 = vadd.f32 %v1169, %v1170
    %1172 = vrot.lane.b32.xlu0 %v1171, 32
    %v1173 = vpop.permute.xlu0 %1172
    %v1174 = vadd.f32 %v1171, %v1173
    %1175 = vrot.lane.b32.xlu0 %v1174, 64
    %v1176 = vpop.permute.xlu0 %1175
    %v1177 = vadd.f32 %v1174, %v1176
    %v1178 = vmul.f32 %v1177, 0.03125
    %v1179 = vlaneseq
    %v1180 = vshrl.u32 %v1179, 7
    %v1181 = vsub.s32 0, %v1180
    %v1182 = vrot.slane %v1178, %v1181
    %v1183 = vsub.f32 %v1165, %v1182
    %v1184 = vmul.f32 %v1183, %v1183
    %v1185 = vrot.slane %v1184, 4
    %v1186 = vadd.f32 %v1184, %v1185
    %v1187 = vrot.slane %v1186, 2
    %v1188 = vadd.f32 %v1186, %v1187
    %v1189 = vrot.slane %v1188, 1
    %v1190 = vadd.f32 %v1188, %v1189
    %1191 = vrot.lane.b32.xlu0 %v1190, 32
    %v1192 = vpop.permute.xlu0 %1191
    %v1193 = vadd.f32 %v1190, %v1192
    %1194 = vrot.lane.b32.xlu0 %v1193, 64
    %v1195 = vpop.permute.xlu0 %1194
    %v1196 = vadd.f32 %v1193, %v1195
    %v1197 = vmul.f32 %v1196, 0.03125
    %v1198 = vadd.f32 %v1197, 1e-05
    %v1199 = vrsqrt.pop %v1198
    %v1200 = vlaneseq
    %v1201 = vshrl.u32 %v1200, 7
    %v1202 = vsub.s32 0, %v1201
    %v1203 = vrot.slane %v1199, %v1202
    %v1204 = vmul.f32 %v1183, %v1203
    %1205 = vst [vmem:[#allocation2 + $0x2] sm:$0xff] %v1204
    %v1206 = vld [vmem:[#allocation2] sm:$0xff]
    %v1207 = vld [vmem:[#allocation2 + $0x2] sm:$0xff]
    %v1208 = vld [vmem:[#allocation2 + $0x4] sm:$0xff]
    %s1209 = scalar_lea.vmem [#allocation6], 768
    %v1210 = vld [vmem:[%s1209] sm:$0xff]
    %v1211 = vld [vmem:[%s1209 + $0x8] sm:$0xff]
    %v1212 = vld [vmem:[%s1209 + $0x10] sm:$0xff]
    %v1213 = vld [vmem:[%s1209 + $0x18] sm:$0xff]
    %v1214 = vld [vmem:[%s1209 + $0x20] sm:$0xff]
    %v1215 = vld [vmem:[%s1209 + $0x28] sm:$0xff]
    %v1216 = vld [vmem:[%s1209 + $0x30] sm:$0xff]
    %v1217 = vld [vmem:[%s1209 + $0x38] sm:$0xff]
    %v1218 = vld [vmem:[%s1209 + $0x40] sm:$0xff]
    %v1219 = vld [vmem:[%s1209 + $0x48] sm:$0xff]
    %v1220 = vld [vmem:[%s1209 + $0x50] sm:$0xff]
    %v1221 = vld [vmem:[%s1209 + $0x58] sm:$0xff]
    %v1222 = vld [vmem:[%s1209 + $0x60] sm:$0xff]
    %v1223 = vld [vmem:[%s1209 + $0x68] sm:$0xff]
    %v1224 = vld [vmem:[%s1209 + $0x70] sm:$0xff]
    %v1225 = vld [vmem:[%s1209 + $0x78] sm:$0xff]
    %v1226 = vld [vmem:[%s1209 + $0x80] sm:$0xff]
    %v1227 = vld [vmem:[%s1209 + $0x88] sm:$0xff]
    %v1228 = vld [vmem:[%s1209 + $0x90] sm:$0xff]
    %v1229 = vld [vmem:[%s1209 + $0x98] sm:$0xff]
    %v1230 = vld [vmem:[%s1209 + $0xa0] sm:$0xff]
    %v1231 = vld [vmem:[%s1209 + $0xa8] sm:$0xff]
    %v1232 = vld [vmem:[%s1209 + $0xb0] sm:$0xff]
    %v1233 = vld [vmem:[%s1209 + $0xb8] sm:$0xff]
    %v1234 = vld [vmem:[%s1209 + $0xc0] sm:$0xff]
    %v1235 = vld [vmem:[%s1209 + $0xc8] sm:$0xff]
    %v1236 = vld [vmem:[%s1209 + $0xd0] sm:$0xff]
    %v1237 = vld [vmem:[%s1209 + $0xd8] sm:$0xff]
    %v1238 = vld [vmem:[%s1209 + $0xe0] sm:$0xff]
    %v1239 = vld [vmem:[%s1209 + $0xe8] sm:$0xff]
    %v1240 = vld [vmem:[%s1209 + $0xf0] sm:$0xff]
    %v1241 = vld [vmem:[%s1209 + $0xf8] sm:$0xff]
    %v1242 = vld [vmem:[%s1209 + $0x100] sm:$0xff]
    %v1243 = vld [vmem:[%s1209 + $0x108] sm:$0xff]
    %v1244 = vld [vmem:[%s1209 + $0x110] sm:$0xff]
    %v1245 = vld [vmem:[%s1209 + $0x118] sm:$0xff]
    %v1246 = vld [vmem:[%s1209 + $0x120] sm:$0xff]
    %v1247 = vld [vmem:[%s1209 + $0x128] sm:$0xff]
    %v1248 = vld [vmem:[%s1209 + $0x130] sm:$0xff]
    %v1249 = vld [vmem:[%s1209 + $0x138] sm:$0xff]
    %v1250 = vld [vmem:[%s1209 + $0x140] sm:$0xff]
    %v1251 = vld [vmem:[%s1209 + $0x148] sm:$0xff]
    %v1252 = vld [vmem:[%s1209 + $0x150] sm:$0xff]
    %v1253 = vld [vmem:[%s1209 + $0x158] sm:$0xff]
    %v1254 = vld [vmem:[%s1209 + $0x160] sm:$0xff]
    %v1255 = vld [vmem:[%s1209 + $0x168] sm:$0xff]
    %v1256 = vld [vmem:[%s1209 + $0x170] sm:$0xff]
    %v1257 = vld [vmem:[%s1209 + $0x178] sm:$0xff]
    %1258 = vmatprep.subr.mxu0 0.0
    %1259 = vmatpush1.msra.mxu0 %v1210
    %1260 = vmatprep.subr.mxu0 0.0
    %1261 = vmatpush1.msra.mxu0 %v1211
    %1262 = vmatprep.subr.mxu0 0.0
    %1263 = vmatpush1.msra.mxu0 %v1212
    %1264 = vmatprep.subr.mxu0 0.0
    %1265 = vmatpush1.msra.mxu0 %v1213
    %1266 = vmatprep.subr.mxu0 0.0
    %1267 = vmatpush1.msra.mxu0 %v1214
    %1268 = vmatprep.subr.mxu0 0.0
    %1269 = vmatpush1.msra.mxu0 %v1215
    %1270 = vmatprep.subr.mxu0 0.0
    %1271 = vmatpush1.msra.mxu0 %v1216
    %1272 = vmatprep.subr.mxu0 0.0
    %1273 = vmatpush1.msra.mxu0 %v1217
    %1274 = vmatprep.subr.mxu0 0.0
    %1275 = vmatpush1.msra.mxu0 %v1218
    %1276 = vmatprep.subr.mxu0 0.0
    %1277 = vmatpush1.msra.mxu0 %v1219
    %1278 = vmatprep.subr.mxu0 0.0
    %1279 = vmatpush1.msra.mxu0 %v1220
    %1280 = vmatprep.subr.mxu0 0.0
    %1281 = vmatpush1.msra.mxu0 %v1221
    %1282 = vmatprep.subr.mxu0 0.0
    %1283 = vmatpush1.msra.mxu0 %v1222
    %1284 = vmatprep.subr.mxu0 0.0
    %1285 = vmatpush1.msra.mxu0 %v1223
    %1286 = vmatprep.subr.mxu0 0.0
    %1287 = vmatpush1.msra.mxu0 %v1224
    %1288 = vmatprep.subr.mxu0 0.0
    %1289 = vmatpush1.msra.mxu0 %v1225
    %1290 = vmatprep.subr.mxu0 0.0
    %1291 = vmatpush1.msra.mxu0 %v1226
    %1292 = vmatprep.subr.mxu0 0.0
    %1293 = vmatpush1.msra.mxu0 %v1227
    %1294 = vmatprep.subr.mxu0 0.0
    %1295 = vmatpush1.msra.mxu0 %v1228
    %1296 = vmatprep.subr.mxu0 0.0
    %1297 = vmatpush1.msra.mxu0 %v1229
    %1298 = vmatprep.subr.mxu0 0.0
    %1299 = vmatpush1.msra.mxu0 %v1230
    %1300 = vmatprep.subr.mxu0 0.0
    %1301 = vmatpush1.msra.mxu0 %v1231
    %1302 = vmatprep.subr.mxu0 0.0
    %1303 = vmatpush1.msra.mxu0 %v1232
    %1304 = vmatprep.subr.mxu0 0.0
    %1305 = vmatpush1.msra.mxu0 %v1233
    %1306 = vmatprep.subr.mxu0 0.0
    %1307 = vmatpush1.msra.mxu0 %v1234
    %1308 = vmatprep.subr.mxu0 0.0
    %1309 = vmatpush1.msra.mxu0 %v1235
    %1310 = vmatprep.subr.mxu0 0.0
    %1311 = vmatpush1.msra.mxu0 %v1236
    %1312 = vmatprep.subr.mxu0 0.0
    %1313 = vmatpush1.msra.mxu0 %v1237
    %1314 = vmatprep.subr.mxu0 0.0
    %1315 = vmatpush1.msra.mxu0 %v1238
    %1316 = vmatprep.subr.mxu0 0.0
    %1317 = vmatpush1.msra.mxu0 %v1239
    %1318 = vmatprep.subr.mxu0 0.0
    %1319 = vmatpush1.msra.mxu0 %v1240
    %1320 = vmatprep.subr.mxu0 0.0
    %1321 = vmatpush1.msra.mxu0 %v1241
    %1322 = vmatprep.mubr.f32.mxu0 %v1207
    %1323 = vmatmul.mubr.f32.gmra.mrb[0].mxu0 %v1206
    %v1324 = vpop.f32.mrb[0].mxu0
    %v1325 = vadd.f32 0.0, %v1324
    %v1326 = vpop.f32.mrb[0].mxu0
    %1327 = vdwg.mxu0
    %1328 = vmatprep.subr.mxu0 0.0
    %1329 = vmatpush1.msra.mxu0 %v1242
    %1330 = vmatprep.subr.mxu0 0.0
    %1331 = vmatpush1.msra.mxu0 %v1243
    %1332 = vmatprep.subr.mxu0 0.0
    %1333 = vmatpush1.msra.mxu0 %v1244
    %1334 = vmatprep.subr.mxu0 0.0
    %1335 = vmatpush1.msra.mxu0 %v1245
    %1336 = vmatprep.subr.mxu0 0.0
    %1337 = vmatpush1.msra.mxu0 %v1246
    %1338 = vmatprep.subr.mxu0 0.0
    %1339 = vmatpush1.msra.mxu0 %v1247
    %1340 = vmatprep.subr.mxu0 0.0
    %1341 = vmatpush1.msra.mxu0 %v1248
    %1342 = vmatprep.subr.mxu0 0.0
    %1343 = vmatpush1.msra.mxu0 %v1249
    %1344 = vmatprep.subr.mxu0 0.0
    %1345 = vmatpush1.msra.mxu0 %v1250
    %1346 = vmatprep.subr.mxu0 0.0
    %1347 = vmatpush1.msra.mxu0 %v1251
    %1348 = vmatprep.subr.mxu0 0.0
    %1349 = vmatpush1.msra.mxu0 %v1252
    %1350 = vmatprep.subr.mxu0 0.0
    %1351 = vmatpush1.msra.mxu0 %v1253
    %1352 = vmatprep.subr.mxu0 0.0
    %1353 = vmatpush1.msra.mxu0 %v1254
    %1354 = vmatprep.subr.mxu0 0.0
    %1355 = vmatpush1.msra.mxu0 %v1255
    %1356 = vmatprep.subr.mxu0 0.0
    %1357 = vmatpush1.msra.mxu0 %v1256
    %1358 = vmatprep.subr.mxu0 0.0
    %1359 = vmatpush1.msra.mxu0 %v1257
    %1360 = vmatprep.subr.mxu0 0.0
    %1361 = vmatpush1.msra.mxu0 0.0
    %1362 = vmatprep.subr.mxu0 0.0
    %1363 = vmatpush1.msra.mxu0 0.0
    %1364 = vmatprep.subr.mxu0 0.0
    %1365 = vmatpush1.msra.mxu0 0.0
    %1366 = vmatprep.subr.mxu0 0.0
    %1367 = vmatpush1.msra.mxu0 0.0
    %1368 = vmatprep.subr.mxu0 0.0
    %1369 = vmatpush1.msra.mxu0 0.0
    %1370 = vmatprep.subr.mxu0 0.0
    %1371 = vmatpush1.msra.mxu0 0.0
    %1372 = vmatprep.subr.mxu0 0.0
    %1373 = vmatpush1.msra.mxu0 0.0
    %1374 = vmatprep.subr.mxu0 0.0
    %1375 = vmatpush1.msra.mxu0 0.0
    %1376 = vmatprep.subr.mxu0 0.0
    %1377 = vmatpush1.msra.mxu0 0.0
    %1378 = vmatprep.subr.mxu0 0.0
    %1379 = vmatpush1.msra.mxu0 0.0
    %1380 = vmatprep.subr.mxu0 0.0
    %1381 = vmatpush1.msra.mxu0 0.0
    %1382 = vmatprep.subr.mxu0 0.0
    %1383 = vmatpush1.msra.mxu0 0.0
    %1384 = vmatprep.subr.mxu0 0.0
    %1385 = vmatpush1.msra.mxu0 0.0
    %1386 = vmatprep.subr.mxu0 0.0
    %1387 = vmatpush1.msra.mxu0 0.0
    %1388 = vmatprep.subr.mxu0 0.0
    %1389 = vmatpush1.msra.mxu0 0.0
    %1390 = vmatprep.subr.mxu0 0.0
    %1391 = vmatpush1.msra.mxu0 0.0
    %1392 = vmatprep.mubr.f32.mxu0 0.0
    %1393 = vmatmul.mubr.f32.gmra.mrb[0].mxu0 %v1208
    %v1394 = vpop.f32.mrb[0].mxu0
    %v1395 = vadd.f32 %v1325, %v1394
    %v1396 = vpop.f32.mrb[0].mxu0
    %1397 = vdwg.mxu0
    %v1398 = vmax.f32 %v1395, 0.0
    %v1399 = vrot.slane %v1398, 4
    %v1400 = vadd.f32 %v1398, %v1399
    %v1401 = vrot.slane %v1400, 2
    %v1402 = vadd.f32 %v1400, %v1401
    %v1403 = vrot.slane %v1402, 1
    %v1404 = vadd.f32 %v1402, %v1403
    %1405 = vrot.lane.b32.xlu0 %v1404, 32
    %v1406 = vpop.permute.xlu0 %1405
    %v1407 = vadd.f32 %v1404, %v1406
    %1408 = vrot.lane.b32.xlu0 %v1407, 64
    %v1409 = vpop.permute.xlu0 %1408
    %v1410 = vadd.f32 %v1407, %v1409
    %v1411 = vmul.f32 %v1410, 0.03125
    %v1412 = vlaneseq
    %v1413 = vshrl.u32 %v1412, 7
    %v1414 = vsub.s32 0, %v1413
    %v1415 = vrot.slane %v1411, %v1414
    %v1416 = vsub.f32 %v1398, %v1415
    %v1417 = vmul.f32 %v1416, %v1416
    %v1418 = vrot.slane %v1417, 4
    %v1419 = vadd.f32 %v1417, %v1418
    %v1420 = vrot.slane %v1419, 2
    %v1421 = vadd.f32 %v1419, %v1420
    %v1422 = vrot.slane %v1421, 1
    %v1423 = vadd.f32 %v1421, %v1422
    %1424 = vrot.lane.b32.xlu0 %v1423, 32
    %v1425 = vpop.permute.xlu0 %1424
    %v1426 = vadd.f32 %v1423, %v1425
    %1427 = vrot.lane.b32.xlu0 %v1426, 64
    %v1428 = vpop.permute.xlu0 %1427
    %v1429 = vadd.f32 %v1426, %v1428
    %v1430 = vmul.f32 %v1429, 0.03125
    %v1431 = vadd.f32 %v1430, 1e-05
    %v1432 = vrsqrt.pop %v1431
    %v1433 = vlaneseq
    %v1434 = vshrl.u32 %v1433, 7
    %v1435 = vsub.s32 0, %v1434
    %v1436 = vrot.slane %v1432, %v1435
    %v1437 = vmul.f32 %v1416, %v1436
    %1438 = vst [vmem:[#allocation2 + $0x2] sm:$0xff] %v1437
    %v1439 = vld [vmem:[#allocation2] sm:$0xff]
    %v1440 = vld [vmem:[#allocation2 + $0x2] sm:$0xff]
    %v1441 = vld [vmem:[#allocation2 + $0x4] sm:$0xff]
    %s1442 = scalar_lea.vmem [#allocation6], 1152
    %v1443 = vld [vmem:[%s1442] sm:$0xff]
    %v1444 = vld [vmem:[%s1442 + $0x8] sm:$0xff]
    %v1445 = vld [vmem:[%s1442 + $0x10] sm:$0xff]
    %v1446 = vld [vmem:[%s1442 + $0x18] sm:$0xff]
    %v1447 = vld [vmem:[%s1442 + $0x20] sm:$0xff]
    %v1448 = vld [vmem:[%s1442 + $0x28] sm:$0xff]
    %v1449 = vld [vmem:[%s1442 + $0x30] sm:$0xff]
    %v1450 = vld [vmem:[%s1442 + $0x38] sm:$0xff]
    %v1451 = vld [vmem:[%s1442 + $0x40] sm:$0xff]
    %v1452 = vld [vmem:[%s1442 + $0x48] sm:$0xff]
    %v1453 = vld [vmem:[%s1442 + $0x50] sm:$0xff]
    %v1454 = vld [vmem:[%s1442 + $0x58] sm:$0xff]
    %v1455 = vld [vmem:[%s1442 + $0x60] sm:$0xff]
    %v1456 = vld [vmem:[%s1442 + $0x68] sm:$0xff]
    %v1457 = vld [vmem:[%s1442 + $0x70] sm:$0xff]
    %v1458 = vld [vmem:[%s1442 + $0x78] sm:$0xff]
    %v1459 = vld [vmem:[%s1442 + $0x80] sm:$0xff]
    %v1460 = vld [vmem:[%s1442 + $0x88] sm:$0xff]
    %v1461 = vld [vmem:[%s1442 + $0x90] sm:$0xff]
    %v1462 = vld [vmem:[%s1442 + $0x98] sm:$0xff]
    %v1463 = vld [vmem:[%s1442 + $0xa0] sm:$0xff]
    %v1464 = vld [vmem:[%s1442 + $0xa8] sm:$0xff]
    %v1465 = vld [vmem:[%s1442 + $0xb0] sm:$0xff]
    %v1466 = vld [vmem:[%s1442 + $0xb8] sm:$0xff]
    %v1467 = vld [vmem:[%s1442 + $0xc0] sm:$0xff]
    %v1468 = vld [vmem:[%s1442 + $0xc8] sm:$0xff]
    %v1469 = vld [vmem:[%s1442 + $0xd0] sm:$0xff]
    %v1470 = vld [vmem:[%s1442 + $0xd8] sm:$0xff]
    %v1471 = vld [vmem:[%s1442 + $0xe0] sm:$0xff]
    %v1472 = vld [vmem:[%s1442 + $0xe8] sm:$0xff]
    %v1473 = vld [vmem:[%s1442 + $0xf0] sm:$0xff]
    %v1474 = vld [vmem:[%s1442 + $0xf8] sm:$0xff]
    %v1475 = vld [vmem:[%s1442 + $0x100] sm:$0xff]
    %v1476 = vld [vmem:[%s1442 + $0x108] sm:$0xff]
    %v1477 = vld [vmem:[%s1442 + $0x110] sm:$0xff]
    %v1478 = vld [vmem:[%s1442 + $0x118] sm:$0xff]
    %v1479 = vld [vmem:[%s1442 + $0x120] sm:$0xff]
    %v1480 = vld [vmem:[%s1442 + $0x128] sm:$0xff]
    %v1481 = vld [vmem:[%s1442 + $0x130] sm:$0xff]
    %v1482 = vld [vmem:[%s1442 + $0x138] sm:$0xff]
    %v1483 = vld [vmem:[%s1442 + $0x140] sm:$0xff]
    %v1484 = vld [vmem:[%s1442 + $0x148] sm:$0xff]
    %v1485 = vld [vmem:[%s1442 + $0x150] sm:$0xff]
    %v1486 = vld [vmem:[%s1442 + $0x158] sm:$0xff]
    %v1487 = vld [vmem:[%s1442 + $0x160] sm:$0xff]
    %v1488 = vld [vmem:[%s1442 + $0x168] sm:$0xff]
    %v1489 = vld [vmem:[%s1442 + $0x170] sm:$0xff]
    %v1490 = vld [vmem:[%s1442 + $0x178] sm:$0xff]
    %1491 = vmatprep.subr.mxu0 0.0
    %1492 = vmatpush1.msra.mxu0 %v1443
    %1493 = vmatprep.subr.mxu0 0.0
    %1494 = vmatpush1.msra.mxu0 %v1444
    %1495 = vmatprep.subr.mxu0 0.0
    %1496 = vmatpush1.msra.mxu0 %v1445
    %1497 = vmatprep.subr.mxu0 0.0
    %1498 = vmatpush1.msra.mxu0 %v1446
    %1499 = vmatprep.subr.mxu0 0.0
    %1500 = vmatpush1.msra.mxu0 %v1447
    %1501 = vmatprep.subr.mxu0 0.0
    %1502 = vmatpush1.msra.mxu0 %v1448
    %1503 = vmatprep.subr.mxu0 0.0
    %1504 = vmatpush1.msra.mxu0 %v1449
    %1505 = vmatprep.subr.mxu0 0.0
    %1506 = vmatpush1.msra.mxu0 %v1450
    %1507 = vmatprep.subr.mxu0 0.0
    %1508 = vmatpush1.msra.mxu0 %v1451
    %1509 = vmatprep.subr.mxu0 0.0
    %1510 = vmatpush1.msra.mxu0 %v1452
    %1511 = vmatprep.subr.mxu0 0.0
    %1512 = vmatpush1.msra.mxu0 %v1453
    %1513 = vmatprep.subr.mxu0 0.0
    %1514 = vmatpush1.msra.mxu0 %v1454
    %1515 = vmatprep.subr.mxu0 0.0
    %1516 = vmatpush1.msra.mxu0 %v1455
    %1517 = vmatprep.subr.mxu0 0.0
    %1518 = vmatpush1.msra.mxu0 %v1456
    %1519 = vmatprep.subr.mxu0 0.0
    %1520 = vmatpush1.msra.mxu0 %v1457
    %1521 = vmatprep.subr.mxu0 0.0
    %1522 = vmatpush1.msra.mxu0 %v1458
    %1523 = vmatprep.subr.mxu0 0.0
    %1524 = vmatpush1.msra.mxu0 %v1459
    %1525 = vmatprep.subr.mxu0 0.0
    %1526 = vmatpush1.msra.mxu0 %v1460
    %1527 = vmatprep.subr.mxu0 0.0
    %1528 = vmatpush1.msra.mxu0 %v1461
    %1529 = vmatprep.subr.mxu0 0.0
    %1530 = vmatpush1.msra.mxu0 %v1462
    %1531 = vmatprep.subr.mxu0 0.0
    %1532 = vmatpush1.msra.mxu0 %v1463
    %1533 = vmatprep.subr.mxu0 0.0
    %1534 = vmatpush1.msra.mxu0 %v1464
    %1535 = vmatprep.subr.mxu0 0.0
    %1536 = vmatpush1.msra.mxu0 %v1465
    %1537 = vmatprep.subr.mxu0 0.0
    %1538 = vmatpush1.msra.mxu0 %v1466
    %1539 = vmatprep.subr.mxu0 0.0
    %1540 = vmatpush1.msra.mxu0 %v1467
    %1541 = vmatprep.subr.mxu0 0.0
    %1542 = vmatpush1.msra.mxu0 %v1468
    %1543 = vmatprep.subr.mxu0 0.0
    %1544 = vmatpush1.msra.mxu0 %v1469
    %1545 = vmatprep.subr.mxu0 0.0
    %1546 = vmatpush1.msra.mxu0 %v1470
    %1547 = vmatprep.subr.mxu0 0.0
    %1548 = vmatpush1.msra.mxu0 %v1471
    %1549 = vmatprep.subr.mxu0 0.0
    %1550 = vmatpush1.msra.mxu0 %v1472
    %1551 = vmatprep.subr.mxu0 0.0
    %1552 = vmatpush1.msra.mxu0 %v1473
    %1553 = vmatprep.subr.mxu0 0.0
    %1554 = vmatpush1.msra.mxu0 %v1474
    %1555 = vmatprep.mubr.f32.mxu0 %v1440
    %1556 = vmatmul.mubr.f32.gmra.mrb[0].mxu0 %v1439
    %v1557 = vpop.f32.mrb[0].mxu0
    %v1558 = vadd.f32 0.0, %v1557
    %v1559 = vpop.f32.mrb[0].mxu0
    %1560 = vdwg.mxu0
    %1561 = vmatprep.subr.mxu0 0.0
    %1562 = vmatpush1.msra.mxu0 %v1475
    %1563 = vmatprep.subr.mxu0 0.0
    %1564 = vmatpush1.msra.mxu0 %v1476
    %1565 = vmatprep.subr.mxu0 0.0
    %1566 = vmatpush1.msra.mxu0 %v1477
    %1567 = vmatprep.subr.mxu0 0.0
    %1568 = vmatpush1.msra.mxu0 %v1478
    %1569 = vmatprep.subr.mxu0 0.0
    %1570 = vmatpush1.msra.mxu0 %v1479
    %1571 = vmatprep.subr.mxu0 0.0
    %1572 = vmatpush1.msra.mxu0 %v1480
    %1573 = vmatprep.subr.mxu0 0.0
    %1574 = vmatpush1.msra.mxu0 %v1481
    %1575 = vmatprep.subr.mxu0 0.0
    %1576 = vmatpush1.msra.mxu0 %v1482
    %1577 = vmatprep.subr.mxu0 0.0
    %1578 = vmatpush1.msra.mxu0 %v1483
    %1579 = vmatprep.subr.mxu0 0.0
    %1580 = vmatpush1.msra.mxu0 %v1484
    %1581 = vmatprep.subr.mxu0 0.0
    %1582 = vmatpush1.msra.mxu0 %v1485
    %1583 = vmatprep.subr.mxu0 0.0
    %1584 = vmatpush1.msra.mxu0 %v1486
    %1585 = vmatprep.subr.mxu0 0.0
    %1586 = vmatpush1.msra.mxu0 %v1487
    %1587 = vmatprep.subr.mxu0 0.0
    %1588 = vmatpush1.msra.mxu0 %v1488
    %1589 = vmatprep.subr.mxu0 0.0
    %1590 = vmatpush1.msra.mxu0 %v1489
    %1591 = vmatprep.subr.mxu0 0.0
    %1592 = vmatpush1.msra.mxu0 %v1490
    %1593 = vmatprep.subr.mxu0 0.0
    %1594 = vmatpush1.msra.mxu0 0.0
    %1595 = vmatprep.subr.mxu0 0.0
    %1596 = vmatpush1.msra.mxu0 0.0
    %1597 = vmatprep.subr.mxu0 0.0
    %1598 = vmatpush1.msra.mxu0 0.0
    %1599 = vmatprep.subr.mxu0 0.0
    %1600 = vmatpush1.msra.mxu0 0.0
    %1601 = vmatprep.subr.mxu0 0.0
    %1602 = vmatpush1.msra.mxu0 0.0
    %1603 = vmatprep.subr.mxu0 0.0
    %1604 = vmatpush1.msra.mxu0 0.0
    %1605 = vmatprep.subr.mxu0 0.0
    %1606 = vmatpush1.msra.mxu0 0.0
    %1607 = vmatprep.subr.mxu0 0.0
    %1608 = vmatpush1.msra.mxu0 0.0
    %1609 = vmatprep.subr.mxu0 0.0
    %1610 = vmatpush1.msra.mxu0 0.0
    %1611 = vmatprep.subr.mxu0 0.0
    %1612 = vmatpush1.msra.mxu0 0.0
    %1613 = vmatprep.subr.mxu0 0.0
    %1614 = vmatpush1.msra.mxu0 0.0
    %1615 = vmatprep.subr.mxu0 0.0
    %1616 = vmatpush1.msra.mxu0 0.0
    %1617 = vmatprep.subr.mxu0 0.0
    %1618 = vmatpush1.msra.mxu0 0.0
    %1619 = vmatprep.subr.mxu0 0.0
    %1620 = vmatpush1.msra.mxu0 0.0
    %1621 = vmatprep.subr.mxu0 0.0
    %1622 = vmatpush1.msra.mxu0 0.0
    %1623 = vmatprep.subr.mxu0 0.0
    %1624 = vmatpush1.msra.mxu0 0.0
    %1625 = vmatprep.mubr.f32.mxu0 0.0
    %1626 = vmatmul.mubr.f32.gmra.mrb[0].mxu0 %v1441
    %v1627 = vpop.f32.mrb[0].mxu0
    %v1628 = vadd.f32 %v1558, %v1627
    %v1629 = vpop.f32.mrb[0].mxu0
    %1630 = vdwg.mxu0
    %v1631 = vmax.f32 %v1628, 0.0
    %v1632 = vadd.f32 %v1631, %v1165
    %v1633 = vrot.slane %v1632, 4
    %v1634 = vadd.f32 %v1632, %v1633
    %v1635 = vrot.slane %v1634, 2
    %v1636 = vadd.f32 %v1634, %v1635
    %v1637 = vrot.slane %v1636, 1
    %v1638 = vadd.f32 %v1636, %v1637
    %1639 = vrot.lane.b32.xlu0 %v1638, 32
    %v1640 = vpop.permute.xlu0 %1639
    %v1641 = vadd.f32 %v1638, %v1640
    %1642 = vrot.lane.b32.xlu0 %v1641, 64
    %v1643 = vpop.permute.xlu0 %1642
    %v1644 = vadd.f32 %v1641, %v1643
    %v1645 = vmul.f32 %v1644, 0.03125
    %v1646 = vlaneseq
    %v1647 = vshrl.u32 %v1646, 7
    %v1648 = vsub.s32 0, %v1647
    %v1649 = vrot.slane %v1645, %v1648
    %v1650 = vsub.f32 %v1632, %v1649
    %v1651 = vmul.f32 %v1650, %v1650
    %v1652 = vrot.slane %v1651, 4
    %v1653 = vadd.f32 %v1651, %v1652
    %v1654 = vrot.slane %v1653, 2
    %v1655 = vadd.f32 %v1653, %v1654
    %v1656 = vrot.slane %v1655, 1
    %v1657 = vadd.f32 %v1655, %v1656
    %1658 = vrot.lane.b32.xlu0 %v1657, 32
    %v1659 = vpop.permute.xlu0 %1658
    %v1660 = vadd.f32 %v1657, %v1659
    %1661 = vrot.lane.b32.xlu0 %v1660, 64
    %v1662 = vpop.permute.xlu0 %1661
    %v1663 = vadd.f32 %v1660, %v1662
    %v1664 = vmul.f32 %v1663, 0.03125
    %v1665 = vadd.f32 %v1664, 1e-05
    %v1666 = vrsqrt.pop %v1665
    %v1667 = vlaneseq
    %v1668 = vshrl.u32 %v1667, 7
    %v1669 = vsub.s32 0, %v1668
    %v1670 = vrot.slane %v1666, %v1669
    %v1671 = vmul.f32 %v1650, %v1670
    %1672 = vst [vmem:[#allocation2 + $0x2] sm:$0xff] %v1671
    %v1673 = vld [vmem:[#allocation2] sm:$0xff]
    %v1674 = vld [vmem:[#allocation2 + $0x2] sm:$0xff]
    %v1675 = vld [vmem:[#allocation2 + $0x4] sm:$0xff]
    %s1676 = scalar_lea.vmem [#allocation6], 1536
    %v1677 = vld [vmem:[%s1676] sm:$0xff]
    %v1678 = vld [vmem:[%s1676 + $0x8] sm:$0xff]
    %v1679 = vld [vmem:[%s1676 + $0x10] sm:$0xff]
    %v1680 = vld [vmem:[%s1676 + $0x18] sm:$0xff]
    %v1681 = vld [vmem:[%s1676 + $0x20] sm:$0xff]
    %v1682 = vld [vmem:[%s1676 + $0x28] sm:$0xff]
    %v1683 = vld [vmem:[%s1676 + $0x30] sm:$0xff]
    %v1684 = vld [vmem:[%s1676 + $0x38] sm:$0xff]
    %v1685 = vld [vmem:[%s1676 + $0x40] sm:$0xff]
    %v1686 = vld [vmem:[%s1676 + $0x48] sm:$0xff]
    %v1687 = vld [vmem:[%s1676 + $0x50] sm:$0xff]
    %v1688 = vld [vmem:[%s1676 + $0x58] sm:$0xff]
    %v1689 = vld [vmem:[%s1676 + $0x60] sm:$0xff]
    %v1690 = vld [vmem:[%s1676 + $0x68] sm:$0xff]
    %v1691 = vld [vmem:[%s1676 + $0x70] sm:$0xff]
    %v1692 = vld [vmem:[%s1676 + $0x78] sm:$0xff]
    %v1693 = vld [vmem:[%s1676 + $0x80] sm:$0xff]
    %v1694 = vld [vmem:[%s1676 + $0x88] sm:$0xff]
    %v1695 = vld [vmem:[%s1676 + $0x90] sm:$0xff]
    %v1696 = vld [vmem:[%s1676 + $0x98] sm:$0xff]
    %v1697 = vld [vmem:[%s1676 + $0xa0] sm:$0xff]
    %v1698 = vld [vmem:[%s1676 + $0xa8] sm:$0xff]
    %v1699 = vld [vmem:[%s1676 + $0xb0] sm:$0xff]
    %v1700 = vld [vmem:[%s1676 + $0xb8] sm:$0xff]
    %v1701 = vld [vmem:[%s1676 + $0xc0] sm:$0xff]
    %v1702 = vld [vmem:[%s1676 + $0xc8] sm:$0xff]
    %v1703 = vld [vmem:[%s1676 + $0xd0] sm:$0xff]
    %v1704 = vld [vmem:[%s1676 + $0xd8] sm:$0xff]
    %v1705 = vld [vmem:[%s1676 + $0xe0] sm:$0xff]
    %v1706 = vld [vmem:[%s1676 + $0xe8] sm:$0xff]
    %v1707 = vld [vmem:[%s1676 + $0xf0] sm:$0xff]
    %v1708 = vld [vmem:[%s1676 + $0xf8] sm:$0xff]
    %v1709 = vld [vmem:[%s1676 + $0x100] sm:$0xff]
    %v1710 = vld [vmem:[%s1676 + $0x108] sm:$0xff]
    %v1711 = vld [vmem:[%s1676 + $0x110] sm:$0xff]
    %v1712 = vld [vmem:[%s1676 + $0x118] sm:$0xff]
    %v1713 = vld [vmem:[%s1676 + $0x120] sm:$0xff]
    %v1714 = vld [vmem:[%s1676 + $0x128] sm:$0xff]
    %v1715 = vld [vmem:[%s1676 + $0x130] sm:$0xff]
    %v1716 = vld [vmem:[%s1676 + $0x138] sm:$0xff]
    %v1717 = vld [vmem:[%s1676 + $0x140] sm:$0xff]
    %v1718 = vld [vmem:[%s1676 + $0x148] sm:$0xff]
    %v1719 = vld [vmem:[%s1676 + $0x150] sm:$0xff]
    %v1720 = vld [vmem:[%s1676 + $0x158] sm:$0xff]
    %v1721 = vld [vmem:[%s1676 + $0x160] sm:$0xff]
    %v1722 = vld [vmem:[%s1676 + $0x168] sm:$0xff]
    %v1723 = vld [vmem:[%s1676 + $0x170] sm:$0xff]
    %v1724 = vld [vmem:[%s1676 + $0x178] sm:$0xff]
    %1725 = vmatprep.subr.mxu0 0.0
    %1726 = vmatpush1.msra.mxu0 %v1677
    %1727 = vmatprep.subr.mxu0 0.0
    %1728 = vmatpush1.msra.mxu0 %v1678
    %1729 = vmatprep.subr.mxu0 0.0
    %1730 = vmatpush1.msra.mxu0 %v1679
    %1731 = vmatprep.subr.mxu0 0.0
    %1732 = vmatpush1.msra.mxu0 %v1680
    %1733 = vmatprep.subr.mxu0 0.0
    %1734 = vmatpush1.msra.mxu0 %v1681
    %1735 = vmatprep.subr.mxu0 0.0
    %1736 = vmatpush1.msra.mxu0 %v1682
    %1737 = vmatprep.subr.mxu0 0.0
    %1738 = vmatpush1.msra.mxu0 %v1683
    %1739 = vmatprep.subr.mxu0 0.0
    %1740 = vmatpush1.msra.mxu0 %v1684
    %1741 = vmatprep.subr.mxu0 0.0
    %1742 = vmatpush1.msra.mxu0 %v1685
    %1743 = vmatprep.subr.mxu0 0.0
    %1744 = vmatpush1.msra.mxu0 %v1686
    %1745 = vmatprep.subr.mxu0 0.0
    %1746 = vmatpush1.msra.mxu0 %v1687
    %1747 = vmatprep.subr.mxu0 0.0
    %1748 = vmatpush1.msra.mxu0 %v1688
    %1749 = vmatprep.subr.mxu0 0.0
    %1750 = vmatpush1.msra.mxu0 %v1689
    %1751 = vmatprep.subr.mxu0 0.0
    %1752 = vmatpush1.msra.mxu0 %v1690
    %1753 = vmatprep.subr.mxu0 0.0
    %1754 = vmatpush1.msra.mxu0 %v1691
    %1755 = vmatprep.subr.mxu0 0.0
    %1756 = vmatpush1.msra.mxu0 %v1692
    %1757 = vmatprep.subr.mxu0 0.0
    %1758 = vmatpush1.msra.mxu0 %v1693
    %1759 = vmatprep.subr.mxu0 0.0
    %1760 = vmatpush1.msra.mxu0 %v1694
    %1761 = vmatprep.subr.mxu0 0.0
    %1762 = vmatpush1.msra.mxu0 %v1695
    %1763 = vmatprep.subr.mxu0 0.0
    %1764 = vmatpush1.msra.mxu0 %v1696
    %1765 = vmatprep.subr.mxu0 0.0
    %1766 = vmatpush1.msra.mxu0 %v1697
    %1767 = vmatprep.subr.mxu0 0.0
    %1768 = vmatpush1.msra.mxu0 %v1698
    %1769 = vmatprep.subr.mxu0 0.0
    %1770 = vmatpush1.msra.mxu0 %v1699
    %1771 = vmatprep.subr.mxu0 0.0
    %1772 = vmatpush1.msra.mxu0 %v1700
    %1773 = vmatprep.subr.mxu0 0.0
    %1774 = vmatpush1.msra.mxu0 %v1701
    %1775 = vmatprep.subr.mxu0 0.0
    %1776 = vmatpush1.msra.mxu0 %v1702
    %1777 = vmatprep.subr.mxu0 0.0
    %1778 = vmatpush1.msra.mxu0 %v1703
    %1779 = vmatprep.subr.mxu0 0.0
    %1780 = vmatpush1.msra.mxu0 %v1704
    %1781 = vmatprep.subr.mxu0 0.0
    %1782 = vmatpush1.msra.mxu0 %v1705
    %1783 = vmatprep.subr.mxu0 0.0
    %1784 = vmatpush1.msra.mxu0 %v1706
    %1785 = vmatprep.subr.mxu0 0.0
    %1786 = vmatpush1.msra.mxu0 %v1707
    %1787 = vmatprep.subr.mxu0 0.0
    %1788 = vmatpush1.msra.mxu0 %v1708
    %1789 = vmatprep.mubr.f32.mxu0 %v1674
    %1790 = vmatmul.mubr.f32.gmra.mrb[0].mxu0 %v1673
    %v1791 = vpop.f32.mrb[0].mxu0
    %v1792 = vadd.f32 0.0, %v1791
    %v1793 = vpop.f32.mrb[0].mxu0
    %1794 = vdwg.mxu0
    %1795 = vmatprep.subr.mxu0 0.0
    %1796 = vmatpush1.msra.mxu0 %v1709
    %1797 = vmatprep.subr.mxu0 0.0
    %1798 = vmatpush1.msra.mxu0 %v1710
    %1799 = vmatprep.subr.mxu0 0.0
    %1800 = vmatpush1.msra.mxu0 %v1711
    %1801 = vmatprep.subr.mxu0 0.0
    %1802 = vmatpush1.msra.mxu0 %v1712
    %1803 = vmatprep.subr.mxu0 0.0
    %1804 = vmatpush1.msra.mxu0 %v1713
    %1805 = vmatprep.subr.mxu0 0.0
    %1806 = vmatpush1.msra.mxu0 %v1714
    %1807 = vmatprep.subr.mxu0 0.0
    %1808 = vmatpush1.msra.mxu0 %v1715
    %1809 = vmatprep.subr.mxu0 0.0
    %1810 = vmatpush1.msra.mxu0 %v1716
    %1811 = vmatprep.subr.mxu0 0.0
    %1812 = vmatpush1.msra.mxu0 %v1717
    %1813 = vmatprep.subr.mxu0 0.0
    %1814 = vmatpush1.msra.mxu0 %v1718
    %1815 = vmatprep.subr.mxu0 0.0
    %1816 = vmatpush1.msra.mxu0 %v1719
    %1817 = vmatprep.subr.mxu0 0.0
    %1818 = vmatpush1.msra.mxu0 %v1720
    %1819 = vmatprep.subr.mxu0 0.0
    %1820 = vmatpush1.msra.mxu0 %v1721
    %1821 = vmatprep.subr.mxu0 0.0
    %1822 = vmatpush1.msra.mxu0 %v1722
    %1823 = vmatprep.subr.mxu0 0.0
    %1824 = vmatpush1.msra.mxu0 %v1723
    %1825 = vmatprep.subr.mxu0 0.0
    %1826 = vmatpush1.msra.mxu0 %v1724
    %1827 = vmatprep.subr.mxu0 0.0
    %1828 = vmatpush1.msra.mxu0 0.0
    %1829 = vmatprep.subr.mxu0 0.0
    %1830 = vmatpush1.msra.mxu0 0.0
    %1831 = vmatprep.subr.mxu0 0.0
    %1832 = vmatpush1.msra.mxu0 0.0
    %1833 = vmatprep.subr.mxu0 0.0
    %1834 = vmatpush1.msra.mxu0 0.0
    %1835 = vmatprep.subr.mxu0 0.0
    %1836 = vmatpush1.msra.mxu0 0.0
    %1837 = vmatprep.subr.mxu0 0.0
    %1838 = vmatpush1.msra.mxu0 0.0
    %1839 = vmatprep.subr.mxu0 0.0
    %1840 = vmatpush1.msra.mxu0 0.0
    %1841 = vmatprep.subr.mxu0 0.0
    %1842 = vmatpush1.msra.mxu0 0.0
    %1843 = vmatprep.subr.mxu0 0.0
    %1844 = vmatpush1.msra.mxu0 0.0
    %1845 = vmatprep.subr.mxu0 0.0
    %1846 = vmatpush1.msra.mxu0 0.0
    %1847 = vmatprep.subr.mxu0 0.0
    %1848 = vmatpush1.msra.mxu0 0.0
    %1849 = vmatprep.subr.mxu0 0.0
    %1850 = vmatpush1.msra.mxu0 0.0
    %1851 = vmatprep.subr.mxu0 0.0
    %1852 = vmatpush1.msra.mxu0 0.0
    %1853 = vmatprep.subr.mxu0 0.0
    %1854 = vmatpush1.msra.mxu0 0.0
    %1855 = vmatprep.subr.mxu0 0.0
    %1856 = vmatpush1.msra.mxu0 0.0
    %1857 = vmatprep.subr.mxu0 0.0
    %1858 = vmatpush1.msra.mxu0 0.0
    %1859 = vmatprep.mubr.f32.mxu0 0.0
    %1860 = vmatmul.mubr.f32.gmra.mrb[0].mxu0 %v1675
    %v1861 = vpop.f32.mrb[0].mxu0
    %v1862 = vadd.f32 %v1792, %v1861
    %v1863 = vpop.f32.mrb[0].mxu0
    %1864 = vdwg.mxu0
    %v1865 = vmax.f32 %v1862, 0.0
    %v1866 = vrot.slane %v1865, 4
    %v1867 = vadd.f32 %v1865, %v1866
    %v1868 = vrot.slane %v1867, 2
    %v1869 = vadd.f32 %v1867, %v1868
    %v1870 = vrot.slane %v1869, 1
    %v1871 = vadd.f32 %v1869, %v1870
    %1872 = vrot.lane.b32.xlu0 %v1871, 32
    %v1873 = vpop.permute.xlu0 %1872
    %v1874 = vadd.f32 %v1871, %v1873
    %1875 = vrot.lane.b32.xlu0 %v1874, 64
    %v1876 = vpop.permute.xlu0 %1875
    %v1877 = vadd.f32 %v1874, %v1876
    %v1878 = vmul.f32 %v1877, 0.03125
    %v1879 = vlaneseq
    %v1880 = vshrl.u32 %v1879, 7
    %v1881 = vsub.s32 0, %v1880
    %v1882 = vrot.slane %v1878, %v1881
    %v1883 = vsub.f32 %v1865, %v1882
    %v1884 = vmul.f32 %v1883, %v1883
    %v1885 = vrot.slane %v1884, 4
    %v1886 = vadd.f32 %v1884, %v1885
    %v1887 = vrot.slane %v1886, 2
    %v1888 = vadd.f32 %v1886, %v1887
    %v1889 = vrot.slane %v1888, 1
    %v1890 = vadd.f32 %v1888, %v1889
    %1891 = vrot.lane.b32.xlu0 %v1890, 32
    %v1892 = vpop.permute.xlu0 %1891
    %v1893 = vadd.f32 %v1890, %v1892
    %1894 = vrot.lane.b32.xlu0 %v1893, 64
    %v1895 = vpop.permute.xlu0 %1894
    %v1896 = vadd.f32 %v1893, %v1895
    %v1897 = vmul.f32 %v1896, 0.03125
    %v1898 = vadd.f32 %v1897, 1e-05
    %v1899 = vrsqrt.pop %v1898
    %v1900 = vlaneseq
    %v1901 = vshrl.u32 %v1900, 7
    %v1902 = vsub.s32 0, %v1901
    %v1903 = vrot.slane %v1899, %v1902
    %v1904 = vmul.f32 %v1883, %v1903
    %1905 = vst [vmem:[#allocation2 + $0x2] sm:$0xff] %v1904
    %v1906 = vld [vmem:[#allocation2] sm:$0xff]
    %v1907 = vld [vmem:[#allocation2 + $0x2] sm:$0xff]
    %v1908 = vld [vmem:[#allocation2 + $0x4] sm:$0xff]
    %s1909 = scalar_lea.vmem [#allocation6], 1920
    %v1910 = vld [vmem:[%s1909] sm:$0xff]
    %v1911 = vld [vmem:[%s1909 + $0x8] sm:$0xff]
    %v1912 = vld [vmem:[%s1909 + $0x10] sm:$0xff]
    %v1913 = vld [vmem:[%s1909 + $0x18] sm:$0xff]
    %v1914 = vld [vmem:[%s1909 + $0x20] sm:$0xff]
    %v1915 = vld [vmem:[%s1909 + $0x28] sm:$0xff]
    %v1916 = vld [vmem:[%s1909 + $0x30] sm:$0xff]
    %v1917 = vld [vmem:[%s1909 + $0x38] sm:$0xff]
    %v1918 = vld [vmem:[%s1909 + $0x40] sm:$0xff]
    %v1919 = vld [vmem:[%s1909 + $0x48] sm:$0xff]
    %v1920 = vld [vmem:[%s1909 + $0x50] sm:$0xff]
    %v1921 = vld [vmem:[%s1909 + $0x58] sm:$0xff]
    %v1922 = vld [vmem:[%s1909 + $0x60] sm:$0xff]
    %v1923 = vld [vmem:[%s1909 + $0x68] sm:$0xff]
    %v1924 = vld [vmem:[%s1909 + $0x70] sm:$0xff]
    %v1925 = vld [vmem:[%s1909 + $0x78] sm:$0xff]
    %v1926 = vld [vmem:[%s1909 + $0x80] sm:$0xff]
    %v1927 = vld [vmem:[%s1909 + $0x88] sm:$0xff]
    %v1928 = vld [vmem:[%s1909 + $0x90] sm:$0xff]
    %v1929 = vld [vmem:[%s1909 + $0x98] sm:$0xff]
    %v1930 = vld [vmem:[%s1909 + $0xa0] sm:$0xff]
    %v1931 = vld [vmem:[%s1909 + $0xa8] sm:$0xff]
    %v1932 = vld [vmem:[%s1909 + $0xb0] sm:$0xff]
    %v1933 = vld [vmem:[%s1909 + $0xb8] sm:$0xff]
    %v1934 = vld [vmem:[%s1909 + $0xc0] sm:$0xff]
    %v1935 = vld [vmem:[%s1909 + $0xc8] sm:$0xff]
    %v1936 = vld [vmem:[%s1909 + $0xd0] sm:$0xff]
    %v1937 = vld [vmem:[%s1909 + $0xd8] sm:$0xff]
    %v1938 = vld [vmem:[%s1909 + $0xe0] sm:$0xff]
    %v1939 = vld [vmem:[%s1909 + $0xe8] sm:$0xff]
    %v1940 = vld [vmem:[%s1909 + $0xf0] sm:$0xff]
    %v1941 = vld [vmem:[%s1909 + $0xf8] sm:$0xff]
    %v1942 = vld [vmem:[%s1909 + $0x100] sm:$0xff]
    %v1943 = vld [vmem:[%s1909 + $0x108] sm:$0xff]
    %v1944 = vld [vmem:[%s1909 + $0x110] sm:$0xff]
    %v1945 = vld [vmem:[%s1909 + $0x118] sm:$0xff]
    %v1946 = vld [vmem:[%s1909 + $0x120] sm:$0xff]
    %v1947 = vld [vmem:[%s1909 + $0x128] sm:$0xff]
    %v1948 = vld [vmem:[%s1909 + $0x130] sm:$0xff]
    %v1949 = vld [vmem:[%s1909 + $0x138] sm:$0xff]
    %v1950 = vld [vmem:[%s1909 + $0x140] sm:$0xff]
    %v1951 = vld [vmem:[%s1909 + $0x148] sm:$0xff]
    %v1952 = vld [vmem:[%s1909 + $0x150] sm:$0xff]
    %v1953 = vld [vmem:[%s1909 + $0x158] sm:$0xff]
    %v1954 = vld [vmem:[%s1909 + $0x160] sm:$0xff]
    %v1955 = vld [vmem:[%s1909 + $0x168] sm:$0xff]
    %v1956 = vld [vmem:[%s1909 + $0x170] sm:$0xff]
    %v1957 = vld [vmem:[%s1909 + $0x178] sm:$0xff]
    %1958 = vmatprep.subr.mxu0 0.0
    %1959 = vmatpush1.msra.mxu0 %v1910
    %1960 = vmatprep.subr.mxu0 0.0
    %1961 = vmatpush1.msra.mxu0 %v1911
    %1962 = vmatprep.subr.mxu0 0.0
    %1963 = vmatpush1.msra.mxu0 %v1912
    %1964 = vmatprep.subr.mxu0 0.0
    %1965 = vmatpush1.msra.mxu0 %v1913
    %1966 = vmatprep.subr.mxu0 0.0
    %1967 = vmatpush1.msra.mxu0 %v1914
    %1968 = vmatprep.subr.mxu0 0.0
    %1969 = vmatpush1.msra.mxu0 %v1915
    %1970 = vmatprep.subr.mxu0 0.0
    %1971 = vmatpush1.msra.mxu0 %v1916
    %1972 = vmatprep.subr.mxu0 0.0
    %1973 = vmatpush1.msra.mxu0 %v1917
    %1974 = vmatprep.subr.mxu0 0.0
    %1975 = vmatpush1.msra.mxu0 %v1918
    %1976 = vmatprep.subr.mxu0 0.0
    %1977 = vmatpush1.msra.mxu0 %v1919
    %1978 = vmatprep.subr.mxu0 0.0
    %1979 = vmatpush1.msra.mxu0 %v1920
    %1980 = vmatprep.subr.mxu0 0.0
    %1981 = vmatpush1.msra.mxu0 %v1921
    %1982 = vmatprep.subr.mxu0 0.0
    %1983 = vmatpush1.msra.mxu0 %v1922
    %1984 = vmatprep.subr.mxu0 0.0
    %1985 = vmatpush1.msra.mxu0 %v1923
    %1986 = vmatprep.subr.mxu0 0.0
    %1987 = vmatpush1.msra.mxu0 %v1924
    %1988 = vmatprep.subr.mxu0 0.0
    %1989 = vmatpush1.msra.mxu0 %v1925
    %1990 = vmatprep.subr.mxu0 0.0
    %1991 = vmatpush1.msra.mxu0 %v1926
    %1992 = vmatprep.subr.mxu0 0.0
    %1993 = vmatpush1.msra.mxu0 %v1927
    %1994 = vmatprep.subr.mxu0 0.0
    %1995 = vmatpush1.msra.mxu0 %v1928
    %1996 = vmatprep.subr.mxu0 0.0
    %1997 = vmatpush1.msra.mxu0 %v1929
    %1998 = vmatprep.subr.mxu0 0.0
    %1999 = vmatpush1.msra.mxu0 %v1930
    %2000 = vmatprep.subr.mxu0 0.0
    %2001 = vmatpush1.msra.mxu0 %v1931
    %2002 = vmatprep.subr.mxu0 0.0
    %2003 = vmatpush1.msra.mxu0 %v1932
    %2004 = vmatprep.subr.mxu0 0.0
    %2005 = vmatpush1.msra.mxu0 %v1933
    %2006 = vmatprep.subr.mxu0 0.0
    %2007 = vmatpush1.msra.mxu0 %v1934
    %2008 = vmatprep.subr.mxu0 0.0
    %2009 = vmatpush1.msra.mxu0 %v1935
    %2010 = vmatprep.subr.mxu0 0.0
    %2011 = vmatpush1.msra.mxu0 %v1936
    %2012 = vmatprep.subr.mxu0 0.0
    %2013 = vmatpush1.msra.mxu0 %v1937
    %2014 = vmatprep.subr.mxu0 0.0
    %2015 = vmatpush1.msra.mxu0 %v1938
    %2016 = vmatprep.subr.mxu0 0.0
    %2017 = vmatpush1.msra.mxu0 %v1939
    %2018 = vmatprep.subr.mxu0 0.0
    %2019 = vmatpush1.msra.mxu0 %v1940
    %2020 = vmatprep.subr.mxu0 0.0
    %2021 = vmatpush1.msra.mxu0 %v1941
    %2022 = vmatprep.mubr.f32.mxu0 %v1907
    %2023 = vmatmul.mubr.f32.gmra.mrb[0].mxu0 %v1906
    %v2024 = vpop.f32.mrb[0].mxu0
    %v2025 = vadd.f32 0.0, %v2024
    %v2026 = vpop.f32.mrb[0].mxu0
    %2027 = vdwg.mxu0
    %2028 = vmatprep.subr.mxu0 0.0
    %2029 = vmatpush1.msra.mxu0 %v1942
    %2030 = vmatprep.subr.mxu0 0.0
    %2031 = vmatpush1.msra.mxu0 %v1943
    %2032 = vmatprep.subr.mxu0 0.0
    %2033 = vmatpush1.msra.mxu0 %v1944
    %2034 = vmatprep.subr.mxu0 0.0
    %2035 = vmatpush1.msra.mxu0 %v1945
    %2036 = vmatprep.subr.mxu0 0.0
    %2037 = vmatpush1.msra.mxu0 %v1946
    %2038 = vmatprep.subr.mxu0 0.0
    %2039 = vmatpush1.msra.mxu0 %v1947
    %2040 = vmatprep.subr.mxu0 0.0
    %2041 = vmatpush1.msra.mxu0 %v1948
    %2042 = vmatprep.subr.mxu0 0.0
    %2043 = vmatpush1.msra.mxu0 %v1949
    %2044 = vmatprep.subr.mxu0 0.0
    %2045 = vmatpush1.msra.mxu0 %v1950
    %2046 = vmatprep.subr.mxu0 0.0
    %2047 = vmatpush1.msra.mxu0 %v1951
    %2048 = vmatprep.subr.mxu0 0.0
    %2049 = vmatpush1.msra.mxu0 %v1952
    %2050 = vmatprep.subr.mxu0 0.0
    %2051 = vmatpush1.msra.mxu0 %v1953
    %2052 = vmatprep.subr.mxu0 0.0
    %2053 = vmatpush1.msra.mxu0 %v1954
    %2054 = vmatprep.subr.mxu0 0.0
    %2055 = vmatpush1.msra.mxu0 %v1955
    %2056 = vmatprep.subr.mxu0 0.0
    %2057 = vmatpush1.msra.mxu0 %v1956
    %2058 = vmatprep.subr.mxu0 0.0
    %2059 = vmatpush1.msra.mxu0 %v1957
    %2060 = vmatprep.subr.mxu0 0.0
    %2061 = vmatpush1.msra.mxu0 0.0
    %2062 = vmatprep.subr.mxu0 0.0
    %2063 = vmatpush1.msra.mxu0 0.0
    %2064 = vmatprep.subr.mxu0 0.0
    %2065 = vmatpush1.msra.mxu0 0.0
    %2066 = vmatprep.subr.mxu0 0.0
    %2067 = vmatpush1.msra.mxu0 0.0
    %2068 = vmatprep.subr.mxu0 0.0
    %2069 = vmatpush1.msra.mxu0 0.0
    %2070 = vmatprep.subr.mxu0 0.0
    %2071 = vmatpush1.msra.mxu0 0.0
    %2072 = vmatprep.subr.mxu0 0.0
    %2073 = vmatpush1.msra.mxu0 0.0
    %2074 = vmatprep.subr.mxu0 0.0
    %2075 = vmatpush1.msra.mxu0 0.0
    %2076 = vmatprep.subr.mxu0 0.0
    %2077 = vmatpush1.msra.mxu0 0.0
    %2078 = vmatprep.subr.mxu0 0.0
    %2079 = vmatpush1.msra.mxu0 0.0
    %2080 = vmatprep.subr.mxu0 0.0
    %2081 = vmatpush1.msra.mxu0 0.0
    %2082 = vmatprep.subr.mxu0 0.0
    %2083 = vmatpush1.msra.mxu0 0.0
    %2084 = vmatprep.subr.mxu0 0.0
    %2085 = vmatpush1.msra.mxu0 0.0
    %2086 = vmatprep.subr.mxu0 0.0
    %2087 = vmatpush1.msra.mxu0 0.0
    %2088 = vmatprep.subr.mxu0 0.0
    %2089 = vmatpush1.msra.mxu0 0.0
    %2090 = vmatprep.subr.mxu0 0.0
    %2091 = vmatpush1.msra.mxu0 0.0
    %2092 = vmatprep.mubr.f32.mxu0 0.0
    %2093 = vmatmul.mubr.f32.gmra.mrb[0].mxu0 %v1908
    %v2094 = vpop.f32.mrb[0].mxu0
    %v2095 = vadd.f32 %v2025, %v2094
    %v2096 = vpop.f32.mrb[0].mxu0
    %2097 = vdwg.mxu0
    %v2098 = vmax.f32 %v2095, 0.0
    %v2099 = vadd.f32 %v2098, %v1632
    %v2100 = vrot.slane %v2099, 4
    %v2101 = vadd.f32 %v2099, %v2100
    %v2102 = vrot.slane %v2101, 2
    %v2103 = vadd.f32 %v2101, %v2102
    %v2104 = vrot.slane %v2103, 1
    %v2105 = vadd.f32 %v2103, %v2104
    %2106 = vrot.lane.b32.xlu0 %v2105, 32
    %v2107 = vpop.permute.xlu0 %2106
    %v2108 = vadd.f32 %v2105, %v2107
    %2109 = vrot.lane.b32.xlu0 %v2108, 64
    %v2110 = vpop.permute.xlu0 %2109
    %v2111 = vadd.f32 %v2108, %v2110
    %v2112 = vmul.f32 %v2111, 0.03125
    %v2113 = vlaneseq
    %v2114 = vshrl.u32 %v2113, 7
    %v2115 = vsub.s32 0, %v2114
    %v2116 = vrot.slane %v2112, %v2115
    %v2117 = vsub.f32 %v2099, %v2116
    %v2118 = vmul.f32 %v2117, %v2117
    %v2119 = vrot.slane %v2118, 4
    %v2120 = vadd.f32 %v2118, %v2119
    %v2121 = vrot.slane %v2120, 2
    %v2122 = vadd.f32 %v2120, %v2121
    %v2123 = vrot.slane %v2122, 1
    %v2124 = vadd.f32 %v2122, %v2123
    %2125 = vrot.lane.b32.xlu0 %v2124, 32
    %v2126 = vpop.permute.xlu0 %2125
    %v2127 = vadd.f32 %v2124, %v2126
    %2128 = vrot.lane.b32.xlu0 %v2127, 64
    %v2129 = vpop.permute.xlu0 %2128
    %v2130 = vadd.f32 %v2127, %v2129
    %v2131 = vmul.f32 %v2130, 0.03125
    %v2132 = vadd.f32 %v2131, 1e-05
    %v2133 = vrsqrt.pop %v2132
    %v2134 = vlaneseq
    %v2135 = vshrl.u32 %v2134, 7
    %v2136 = vsub.s32 0, %v2135
    %v2137 = vrot.slane %v2133, %v2136
    %v2138 = vmul.f32 %v2117, %v2137
    %v2140 = vrot.slane %v2138, 2
    %v2142 = vadd.f32 %v2138, %v2140
    %v2143 = vrot.slane %v2138, 4
    %v2145 = vadd.f32 %v2142, %v2143
    %v2146 = vrot.slane %v2138, 6
    %v2148 = vadd.f32 %v2145, %v2146
    %2150 = vrot.lane.b32.xlu0 %v2148, 96
    %v2151 = vpop.permute.xlu0 %2150
    %v2153 = vadd.f32 %v2148, %v2151
    %2154 = vrot.lane.b32.xlu0 %v2148, 64
    %v2155 = vpop.permute.xlu0 %2154
    %v2157 = vadd.f32 %v2153, %v2155
    %2158 = vrot.lane.b32.xlu0 %v2148, 32
    %v2159 = vpop.permute.xlu0 %2158
    %v2161 = vadd.f32 %v2157, %v2159
    %v2162 = vmul.f32 %v2161, 0.0625
    %v2163 = vmul.f32 %v2162, %v2162
    %vm2164 = vcmask 254976
    %v2165 = vsel %vm2164, %v2163, 0.0
    %2166 = vadd.xlane.f32.xlu0 %v2165
    %v2167 = vpop.xlane.xlu0 %2166
    %v2168 = vmax.f32 %v2167, 1e-24
    %v2169 = vrsqrt.pop %v2168
    %v2170 = vmul.f32 %v2162, %v2169
    %2171 = vst.msk [vmem:[#allocation8] sm:$0x3] %vm2164, %v2170
    // Predicated region
    $region22: #{triplet_tcresnet8_forward.1} parent=1 // pred_check
      _
    $region23: #{triplet_tcresnet8_forward.1} parent=1 // pred_check_branch
      %2173 = sbr.rel (0) target = $region25
    $region24: #{triplet_tcresnet8_forward.1} parent=1 // pred_region
      %s2175 = ssub.s32 32, 32
      %2176 = vsyncadd [#allocation5], %s2175
      %s2178 = sshll.u32 [#allocation8], 4
      %s2179 = int_to_ptr.vmem [resolvable:$true] %s2178
      %2181 = dma.vmem_to_hbm [thread:$0]  %s2179, 32, %s3, [#allocation5]
    $region25: #{triplet_tcresnet8_forward.1} parent=1 // pred_fallthru
      _
    // Predicated region
    $region26: #{triplet_tcresnet8_forward.1} parent=1 // pred_check
      _
    $region27: #{triplet_tcresnet8_forward.1} parent=1 // pred_check_branch
      %2183 = sbr.rel (0) target = $region29
    $region28: #{triplet_tcresnet8_forward.1} parent=1 // pred_region
      %2184 = dma.done [#allocation5], 32
    $region29: #{triplet_tcresnet8_forward.1} parent=1 // pred_fallthru
      _
    %2185 = vsyncpa [#allocation4], 1
    %2186 = vsyncpa [#allocation7], 1
    %2187 = vsyncpa [#allocation5], 1

</llo_original>
